<compile_context>
chip_gen: v6e
topology: v6e:2x2x1
jax: 0.10.0
libtpu: 0.0.40
codegen_flags: <defaults>
</compile_context>

<pallas_src>
import math
import functools

import jax
import jax.numpy as jnp
from jax import lax
from jax.experimental import pallas as pl
from jax.experimental.pallas import tpu as pltpu


def _mha_kernel(q_in_ref, k_in_ref, v_in_ref,
                wq_ref, bq_ref, wk_ref, bk_ref, wv_ref, bv_ref,
                wo_ref, bo_ref,
                out_ref, *attw_refs,
                head_dim, group_size, need_weights):
    """Grid = (batch, q_tile, head_group); head_group is the inner reduction
    axis for the output-projection accumulation."""
    hg = pl.program_id(2)
    D, G = head_dim, group_size

    # Inputs already bf16 (host-side cast): half the DMA bytes, no VALU casts.
    xq = q_in_ref[...]                      # (Tq, E) bf16
    xk = k_in_ref[...]                      # (S,  E) bf16
    xv = v_in_ref[...]                      # (S,  E) bf16

    # Grouped projections: one (rows, E) @ (E, G*D) MXU pass each, f32 acc.
    # The 1/sqrt(D) softmax scale is folded into wq/bq on the host.
    q = jnp.dot(xq, wq_ref[hg], preferred_element_type=jnp.float32) + bq_ref[hg]
    k = jnp.dot(xk, wk_ref[hg], preferred_element_type=jnp.float32) + bk_ref[hg]
    v = jnp.dot(xv, wv_ref[hg], preferred_element_type=jnp.float32) + bv_ref[hg]

    o_heads = []
    for g in range(G):                      # static (unrolled) loop over heads
        sl = slice(g * D, (g + 1) * D)
        qh = q[:, sl].astype(jnp.bfloat16)          # (Tq, D)
        kh = k[:, sl].astype(jnp.bfloat16)          # (S,  D)
        vh = v[:, sl].astype(jnp.bfloat16)          # (S,  D)

        # NT score matmul (contract shared last dim) -- no XLU transpose of K.
        s = lax.dot_general(qh, kh,
                            dimension_numbers=(((1,), (1,)), ((), ())),
                            preferred_element_type=jnp.float32)     # (Tq, S)

        # Numerically stable softmax; statistics in f32, exact reciprocal
        # (approx=False) so returned rows sum to 1 to f32 precision.
        s = s - jnp.max(s, axis=-1, keepdims=True)
        p = jnp.exp(s)
        recip = pl.reciprocal(jnp.sum(p, axis=-1, keepdims=True), approx=False)

        if need_weights:
            attw_refs[0][g] = (p * recip).astype(attw_refs[0].dtype)

        # PV with unnormalized p; normalize the (Tq, D) result instead of the
        # (Tq, S) probability matrix (cheaper when weights are not emitted).
        oh = jnp.dot(p.astype(jnp.bfloat16), vh,
                     preferred_element_type=jnp.float32)            # (Tq, D)
        o_heads.append((oh * recip).astype(jnp.bfloat16))

    # Single (Tq, G*D) @ (G*D, E) output-projection matmul for the whole group.
    o = jnp.concatenate(o_heads, axis=-1) if G > 1 else o_heads[0]
    contrib = jnp.dot(o, wo_ref[hg], preferred_element_type=jnp.float32)

    # Accumulate across the head-group axis; the out block index does not
    # depend on hg, so it stays VMEM-resident until the last group.
    @pl.when(hg == 0)
    def _init():
        out_ref[...] = contrib + bo_ref[...]

    @pl.when(hg > 0)
    def _accum():
        out_ref[...] = out_ref[...] + contrib


def multihead_attention(query, key, value, params, *, num_heads,
                        need_weights=False):
    """query/key/value: (B, S, E) float32. Returns (output, attn_weights|None)."""
    B, S, E = query.shape
    H = num_heads
    D = E // H

    # Head grouping: largest divisor of H with G*D <= 128 lanes (safe on all
    # TPU generations; fills the MXU output width for the projection matmuls).
    G = 1
    for g in range(H, 0, -1):
        if H % g == 0 and g * D <= 128:
            G = g
            break
    HG = H // G
    GD = G * D

    # Query tiling (bounds VMEM; mandatory for v7x at large S). Demo: Tq == S.
    Tq = 512 if (S > 512 and S % 512 == 0) else S
    NQ = S // Tq

    f32, bf16 = jnp.float32, jnp.bfloat16
    scale = 1.0 / math.sqrt(D)

    # Host-side (free) per-head-group split of the PyTorch (out, in) weights:
    #   q = x @ Wq.T + bq ; out = attn_out @ Wo.T + bo
    # 1/sqrt(D) folded into the q projection; weights pre-cast to bf16.
    wq_g = (params["wq"].T * scale).reshape(E, HG, GD).transpose(1, 0, 2).astype(bf16)
    wk_g = params["wk"].T.reshape(E, HG, GD).transpose(1, 0, 2).astype(bf16)
    wv_g = params["wv"].T.reshape(E, HG, GD).transpose(1, 0, 2).astype(bf16)
    wo_g = params["wo"].T.reshape(HG, GD, E).astype(bf16)
    bq_g = (params["bq"] * scale).reshape(HG, 1, GD).astype(f32)   # biases stay f32
    bk_g = params["bk"].reshape(HG, 1, GD).astype(f32)
    bv_g = params["bv"].reshape(HG, 1, GD).astype(f32)
    bo = params["bo"].reshape(1, E).astype(f32)

    q_bf = query.astype(bf16)
    k_bf = key.astype(bf16)
    v_bf = value.astype(bf16)

    # Inputs: query tiled along Tq; key/value full-S per batch element.
    # (None == squeezed leading block dim.)
    q_spec = pl.BlockSpec((None, Tq, E), lambda b, qi, hg: (b, qi, 0))
    kv_spec = pl.BlockSpec((None, S, E), lambda b, qi, hg: (b, 0, 0))

    # Weights/biases: full-array blocks with constant index maps -> fetched
    # once, VMEM-resident for the whole grid (kernel indexes [hg]).
    wp_spec = pl.BlockSpec((HG, E, GD), lambda b, qi, hg: (0, 0, 0))
    bp_spec = pl.BlockSpec((HG, 1, GD), lambda b, qi, hg: (0, 0, 0))
    wo_spec = pl.BlockSpec((HG, GD, E), lambda b, qi, hg: (0, 0, 0))
    bo_spec = pl.BlockSpec((1, E), lambda b, qi, hg: (0, 0))

    out_spec = pl.BlockSpec((None, Tq, E), lambda b, qi, hg: (b, qi, 0))
    out_struct = jax.ShapeDtypeStruct((B, S, E), f32)

    if need_weights:
        # TODO(synk): emit attn weights in bf16 (halves the dominant HBM
        # stream) if the caller tolerates it; kept f32 for "NumericallyStable".
        attw_spec = pl.BlockSpec((None, G, Tq, S), lambda b, qi, hg: (b, hg, qi, 0))
        out_shape = (out_struct, jax.ShapeDtypeStruct((B, H, S, S), f32))
        out_specs = [out_spec, attw_spec]
    else:
        out_shape = out_struct
        out_specs = out_spec

    kernel = functools.partial(_mha_kernel, head_dim=D, group_size=G,
                               need_weights=need_weights)

    result = pl.pallas_call(
        kernel,
        out_shape=out_shape,
        grid_spec=pltpu.PrefetchScalarGridSpec(
            num_scalar_prefetch=0,
            grid=(B, NQ, HG),
            in_specs=[
                q_spec, kv_spec, kv_spec,
                wp_spec, bp_spec,   # q proj (per head-group)
                wp_spec, bp_spec,   # k proj
                wp_spec, bp_spec,   # v proj
                wo_spec, bo_spec,   # out proj + bias
            ],
            out_specs=out_specs,
        ),
        compiler_params=pltpu.CompilerParams(
            dimension_semantics=("parallel", "parallel", "arbitrary"),
            vmem_limit_bytes=48 * 1024 * 1024),   # explicit; < v7x 64 MiB VMEM
    )(q_bf, k_bf, v_bf,
      wq_g, bq_g, wk_g, bk_g, wv_g, bv_g, wo_g, bo)

    if need_weights:
        return result[0], result[1]
    return result, None


def _reference(query, key, value, params, *, num_heads):
    """Pure-JAX f32 reference mirroring the PyTorch forward."""
    B, S, E = query.shape
    D = E // num_heads

    def lin(x, w, b):
        return jnp.einsum("bse,oe->bso", x, w) + b

    q = lin(query, params["wq"], params["bq"]).reshape(B, S, num_heads, D).transpose(0, 2, 1, 3)
    k = lin(key, params["wk"], params["bk"]).reshape(B, S, num_heads, D).transpose(0, 2, 1, 3)
    v = lin(value, params["wv"], params["bv"]).reshape(B, S, num_heads, D).transpose(0, 2, 1, 3)

    aw = jnp.einsum("bhqd,bhkd->bhqk", q, k) / math.sqrt(D)
    aw = jax.nn.softmax(aw, axis=-1)
    ao = jnp.einsum("bhqk,bhkd->bhqd", aw, v)
    ao = ao.transpose(0, 2, 1, 3).reshape(B, S, E)
    out = lin(ao, params["wo"], params["bo"])
    return out, aw


if __name__ == "__main__":
    B, S, E, H = 2, 8, 32, 4

    key0 = jax.random.PRNGKey(0)
    ks = jax.random.split(key0, 11)
    scale = 1.0 / math.sqrt(E)
    params = {
        "wq": jax.random.uniform(ks[0], (E, E), jnp.float32, -scale, scale),
        "bq": jax.random.uniform(ks[1], (E,), jnp.float32, -scale, scale),
        "wk": jax.random.uniform(ks[2], (E, E), jnp.float32, -scale, scale),
        "bk": jax.random.uniform(ks[3], (E,), jnp.float32, -scale, scale),
        "wv": jax.random.uniform(ks[4], (E, E), jnp.float32, -scale, scale),
        "bv": jax.random.uniform(ks[5], (E,), jnp.float32, -scale, scale),
        "wo": jax.random.uniform(ks[6], (E, E), jnp.float32, -scale, scale),
        "bo": jax.random.uniform(ks[7], (E,), jnp.float32, -scale, scale),
    }

    query = jax.random.normal(ks[8], (B, S, E), jnp.float32)
    key_in = jax.random.normal(ks[9], (B, S, E), jnp.float32)
    value = jax.random.normal(ks[10], (B, S, E), jnp.float32)

    ref_out, ref_attw = _reference(query, key_in, value, params, num_heads=H)

    # Path 1: need_weights=True (returns per-head (B, H, S, S) weights).
    out_w, attw = multihead_attention(query, key_in, value, params,
                                      num_heads=H, need_weights=True)
    out_w = jax.block_until_ready(out_w)
    attw = jax.block_until_ready(attw)

    # Path 2: need_weights=False (module default) -- no attw writeback at all.
    out_nw, none_attw = multihead_attention(query, key_in, value, params,
                                            num_heads=H, need_weights=False)
    out_nw = jax.block_until_ready(out_nw)

    # Tolerances loosened (vs 1e-5) because MXU operands are bf16 with f32
    # accumulation; softmax statistics remain f32.
    assert jnp.allclose(out_w, ref_out, atol=5e-2, rtol=5e-2), "output mismatch (need_weights=True)"
    assert jnp.allclose(out_nw, ref_out, atol=5e-2, rtol=5e-2), "output mismatch (need_weights=False)"
    assert jnp.allclose(attw, ref_attw, atol=2e-2, rtol=2e-2), "attn weights mismatch"
    assert none_attw is None

    print("KERNEL_OK")
</pallas_src>

<mosaic_0001>
module attributes {stable_mosaic.version = 11 : i64} {
  func.func @_mha_kernel(%arg0: i32, %arg1: i32, %arg2: i32, %arg3: memref<1x8x32xbf16, #tpu.memory_space<vmem>>, %arg4: memref<1x8x32xbf16, #tpu.memory_space<vmem>>, %arg5: memref<1x8x32xbf16, #tpu.memory_space<vmem>>, %arg6: memref<1x32x32xbf16, #tpu.memory_space<vmem>>, %arg7: memref<1x1x32xf32, #tpu.memory_space<vmem>>, %arg8: memref<1x32x32xbf16, #tpu.memory_space<vmem>>, %arg9: memref<1x1x32xf32, #tpu.memory_space<vmem>>, %arg10: memref<1x32x32xbf16, #tpu.memory_space<vmem>>, %arg11: memref<1x1x32xf32, #tpu.memory_space<vmem>>, %arg12: memref<1x32x32xbf16, #tpu.memory_space<vmem>>, %arg13: memref<1x32xf32, #tpu.memory_space<vmem>>, %arg14: memref<1x8x32xf32, #tpu.memory_space<vmem>>, %arg15: memref<1x4x8x8xf32, #tpu.memory_space<vmem>>) attributes {dimension_semantics = [#tpu.dimension_semantics<parallel>, #tpu.dimension_semantics<parallel>, #tpu.dimension_semantics<arbitrary>], iteration_bounds = array<i64: 2, 1, 1>, scalar_prefetch = 0 : i64, scratch_operands = 0 : i64, tpu.core_type = #tpu.core_type<tc>, window_params = [{transform_indices = @transform_0, window_bounds = array<i64: 1, 8, 32>}, {transform_indices = @transform_1, window_bounds = array<i64: 1, 8, 32>}, {transform_indices = @transform_2, window_bounds = array<i64: 1, 8, 32>}, {pipeline_mode = #tpu.pipeline_mode<synchronous>, transform_indices = @transform_3, window_bounds = array<i64: 1, 32, 32>}, {pipeline_mode = #tpu.pipeline_mode<synchronous>, transform_indices = @transform_4, window_bounds = array<i64: 1, 1, 32>}, {pipeline_mode = #tpu.pipeline_mode<synchronous>, transform_indices = @transform_5, window_bounds = array<i64: 1, 32, 32>}, {pipeline_mode = #tpu.pipeline_mode<synchronous>, transform_indices = @transform_6, window_bounds = array<i64: 1, 1, 32>}, {pipeline_mode = #tpu.pipeline_mode<synchronous>, transform_indices = @transform_7, window_bounds = array<i64: 1, 32, 32>}, {pipeline_mode = #tpu.pipeline_mode<synchronous>, transform_indices = @transform_8, window_bounds = array<i64: 1, 1, 32>}, {pipeline_mode = #tpu.pipeline_mode<synchronous>, transform_indices = @transform_9, window_bounds = array<i64: 1, 32, 32>}, {pipeline_mode = #tpu.pipeline_mode<synchronous>, transform_indices = @transform_10, window_bounds = array<i64: 1, 32>}, {transform_indices = @transform_11, window_bounds = array<i64: 1, 8, 32>}, {transform_indices = @transform_12, window_bounds = array<i64: 1, 4, 8, 8>}]} {
    %c0 = arith.constant 0 : index
    %c0_0 = arith.constant 0 : index
    %c0_1 = arith.constant 0 : index
    %0 = vector.load %arg3[%c0, %c0_0, %c0_1] : memref<1x8x32xbf16, #tpu.memory_space<vmem>>, vector<1x8x32xbf16>
    %1 = vector.shape_cast %0 : vector<1x8x32xbf16> to vector<8x32xbf16>
    %c0_2 = arith.constant 0 : index
    %c0_3 = arith.constant 0 : index
    %c0_4 = arith.constant 0 : index
    %2 = vector.load %arg4[%c0_2, %c0_3, %c0_4] : memref<1x8x32xbf16, #tpu.memory_space<vmem>>, vector<1x8x32xbf16>
    %3 = vector.shape_cast %2 : vector<1x8x32xbf16> to vector<8x32xbf16>
    %c0_5 = arith.constant 0 : index
    %c0_6 = arith.constant 0 : index
    %c0_7 = arith.constant 0 : index
    %4 = vector.load %arg5[%c0_5, %c0_6, %c0_7] : memref<1x8x32xbf16, #tpu.memory_space<vmem>>, vector<1x8x32xbf16>
    %5 = vector.shape_cast %4 : vector<1x8x32xbf16> to vector<8x32xbf16>
    %6 = arith.index_cast %arg2 : i32 to index
    %c0_8 = arith.constant 0 : index
    %c0_9 = arith.constant 0 : index
    %7 = vector.load %arg6[%6, %c0_8, %c0_9] : memref<1x32x32xbf16, #tpu.memory_space<vmem>>, vector<1x32x32xbf16>
    %8 = vector.shape_cast %7 : vector<1x32x32xbf16> to vector<32x32xbf16>
    %cst = arith.constant dense<0.000000e+00> : vector<8x32xf32>
    %9 = tpu.matmul %1, %8, %cst {dimension_numbers = #tpu.dot_dimension_numbers<[1], [0], [0], [1], [0, 0, 1, 1], [], []>} : vector<8x32xbf16>, vector<32x32xbf16>, vector<8x32xf32> -> vector<8x32xf32>
    %10 = arith.index_cast %arg2 : i32 to index
    %c0_10 = arith.constant 0 : index
    %c0_11 = arith.constant 0 : index
    %11 = vector.load %arg7[%10, %c0_10, %c0_11] : memref<1x1x32xf32, #tpu.memory_space<vmem>>, vector<1x1x32xf32>
    %12 = vector.shape_cast %11 : vector<1x1x32xf32> to vector<1x32xf32>
    %13 = vector.broadcast %12 : vector<1x32xf32> to vector<8x32xf32>
    %14 = arith.addf %9, %13 : vector<8x32xf32>
    %15 = arith.index_cast %arg2 : i32 to index
    %c0_12 = arith.constant 0 : index
    %c0_13 = arith.constant 0 : index
    %16 = vector.load %arg8[%15, %c0_12, %c0_13] : memref<1x32x32xbf16, #tpu.memory_space<vmem>>, vector<1x32x32xbf16>
    %17 = vector.shape_cast %16 : vector<1x32x32xbf16> to vector<32x32xbf16>
    %cst_14 = arith.constant dense<0.000000e+00> : vector<8x32xf32>
    %18 = tpu.matmul %3, %17, %cst_14 {dimension_numbers = #tpu.dot_dimension_numbers<[1], [0], [0], [1], [0, 0, 1, 1], [], []>} : vector<8x32xbf16>, vector<32x32xbf16>, vector<8x32xf32> -> vector<8x32xf32>
    %19 = arith.index_cast %arg2 : i32 to index
    %c0_15 = arith.constant 0 : index
    %c0_16 = arith.constant 0 : index
    %20 = vector.load %arg9[%19, %c0_15, %c0_16] : memref<1x1x32xf32, #tpu.memory_space<vmem>>, vector<1x1x32xf32>
    %21 = vector.shape_cast %20 : vector<1x1x32xf32> to vector<1x32xf32>
    %22 = vector.broadcast %21 : vector<1x32xf32> to vector<8x32xf32>
    %23 = arith.addf %18, %22 : vector<8x32xf32>
    %24 = arith.index_cast %arg2 : i32 to index
    %c0_17 = arith.constant 0 : index
    %c0_18 = arith.constant 0 : index
    %25 = vector.load %arg10[%24, %c0_17, %c0_18] : memref<1x32x32xbf16, #tpu.memory_space<vmem>>, vector<1x32x32xbf16>
    %26 = vector.shape_cast %25 : vector<1x32x32xbf16> to vector<32x32xbf16>
    %cst_19 = arith.constant dense<0.000000e+00> : vector<8x32xf32>
    %27 = tpu.matmul %5, %26, %cst_19 {dimension_numbers = #tpu.dot_dimension_numbers<[1], [0], [0], [1], [0, 0, 1, 1], [], []>} : vector<8x32xbf16>, vector<32x32xbf16>, vector<8x32xf32> -> vector<8x32xf32>
    %28 = arith.index_cast %arg2 : i32 to index
    %c0_20 = arith.constant 0 : index
    %c0_21 = arith.constant 0 : index
    %29 = vector.load %arg11[%28, %c0_20, %c0_21] : memref<1x1x32xf32, #tpu.memory_space<vmem>>, vector<1x1x32xf32>
    %30 = vector.shape_cast %29 : vector<1x1x32xf32> to vector<1x32xf32>
    %31 = vector.broadcast %30 : vector<1x32xf32> to vector<8x32xf32>
    %32 = arith.addf %27, %31 : vector<8x32xf32>
    %33 = vector.extract_strided_slice %14 {offsets = [0, 0], sizes = [8, 8], strides = [1, 1]} : vector<8x32xf32> to vector<8x8xf32>
    %34 = arith.truncf %33 : vector<8x8xf32> to vector<8x8xbf16>
    %35 = vector.extract_strided_slice %23 {offsets = [0, 0], sizes = [8, 8], strides = [1, 1]} : vector<8x32xf32> to vector<8x8xf32>
    %36 = arith.truncf %35 : vector<8x8xf32> to vector<8x8xbf16>
    %37 = vector.extract_strided_slice %32 {offsets = [0, 0], sizes = [8, 8], strides = [1, 1]} : vector<8x32xf32> to vector<8x8xf32>
    %38 = arith.truncf %37 : vector<8x8xf32> to vector<8x8xbf16>
    %cst_22 = arith.constant dense<0.000000e+00> : vector<8x8xf32>
    %39 = tpu.matmul %34, %36, %cst_22 {dimension_numbers = #tpu.dot_dimension_numbers<[1], [1], [0], [0], [0, 0, 1, 0], [], []>} : vector<8x8xbf16>, vector<8x8xbf16>, vector<8x8xf32> -> vector<8x8xf32>
    %cst_23 = arith.constant dense<0xFF800000> : vector<8xf32>
    %40 = vector.multi_reduction <maximumf>, %39, %cst_23 [1] : vector<8x8xf32> to vector<8xf32>
    %41 = vector.shape_cast %40 : vector<8xf32> to vector<8x1xf32>
    %42 = vector.broadcast %41 : vector<8x1xf32> to vector<8x8xf32>
    %43 = arith.subf %39, %42 : vector<8x8xf32>
    %44 = math.exp %43 : vector<8x8xf32>
    %cst_24 = arith.constant dense<0.000000e+00> : vector<8xf32>
    %45 = vector.multi_reduction <add>, %44, %cst_24 [1] : vector<8x8xf32> to vector<8xf32>
    %46 = vector.shape_cast %45 : vector<8xf32> to vector<8x1xf32>
    %47 = tpu.reciprocal %46 : vector<8x1xf32> -> vector<8x1xf32>
    %48 = vector.broadcast %47 : vector<8x1xf32> to vector<8x8xf32>
    %49 = arith.mulf %44, %48 : vector<8x8xf32>
    %c0_25 = arith.constant 0 : index
    %c0_26 = arith.constant 0 : index
    %c0_27 = arith.constant 0 : index
    %c0_28 = arith.constant 0 : index
    %50 = vector.load %arg15[%c0_25, %c0_26, %c0_27, %c0_28] : memref<1x4x8x8xf32, #tpu.memory_space<vmem>>, vector<1x1x8x8xf32>
    %51 = vector.shape_cast %50 : vector<1x1x8x8xf32> to vector<8x8xf32>
    %52 = vector.shape_cast %49 : vector<8x8xf32> to vector<1x1x8x8xf32>
    tpu.vector_store %arg15[%c0_25, %c0_26, %c0_27, %c0_28], %52 {strides = array<i32>} : memref<1x4x8x8xf32, #tpu.memory_space<vmem>>, vector<1x1x8x8xf32>,
    %53 = arith.truncf %44 : vector<8x8xf32> to vector<8x8xbf16>
    %cst_29 = arith.constant dense<0.000000e+00> : vector<8x8xf32>
    %54 = tpu.matmul %53, %38, %cst_29 {dimension_numbers = #tpu.dot_dimension_numbers<[1], [0], [0], [1], [0, 0, 1, 1], [], []>} : vector<8x8xbf16>, vector<8x8xbf16>, vector<8x8xf32> -> vector<8x8xf32>
    %55 = vector.broadcast %47 : vector<8x1xf32> to vector<8x8xf32>
    %56 = arith.mulf %54, %55 : vector<8x8xf32>
    %57 = arith.truncf %56 : vector<8x8xf32> to vector<8x8xbf16>
    %58 = vector.extract_strided_slice %14 {offsets = [0, 8], sizes = [8, 8], strides = [1, 1]} : vector<8x32xf32> to vector<8x8xf32>
    %59 = arith.truncf %58 : vector<8x8xf32> to vector<8x8xbf16>
    %60 = vector.extract_strided_slice %23 {offsets = [0, 8], sizes = [8, 8], strides = [1, 1]} : vector<8x32xf32> to vector<8x8xf32>
    %61 = arith.truncf %60 : vector<8x8xf32> to vector<8x8xbf16>
    %62 = vector.extract_strided_slice %32 {offsets = [0, 8], sizes = [8, 8], strides = [1, 1]} : vector<8x32xf32> to vector<8x8xf32>
    %63 = arith.truncf %62 : vector<8x8xf32> to vector<8x8xbf16>
    %cst_30 = arith.constant dense<0.000000e+00> : vector<8x8xf32>
    %64 = tpu.matmul %59, %61, %cst_30 {dimension_numbers = #tpu.dot_dimension_numbers<[1], [1], [0], [0], [0, 0, 1, 0], [], []>} : vector<8x8xbf16>, vector<8x8xbf16>, vector<8x8xf32> -> vector<8x8xf32>
    %cst_31 = arith.constant dense<0xFF800000> : vector<8xf32>
    %65 = vector.multi_reduction <maximumf>, %64, %cst_31 [1] : vector<8x8xf32> to vector<8xf32>
    %66 = vector.shape_cast %65 : vector<8xf32> to vector<8x1xf32>
    %67 = vector.broadcast %66 : vector<8x1xf32> to vector<8x8xf32>
    %68 = arith.subf %64, %67 : vector<8x8xf32>
    %69 = math.exp %68 : vector<8x8xf32>
    %cst_32 = arith.constant dense<0.000000e+00> : vector<8xf32>
    %70 = vector.multi_reduction <add>, %69, %cst_32 [1] : vector<8x8xf32> to vector<8xf32>
    %71 = vector.shape_cast %70 : vector<8xf32> to vector<8x1xf32>
    %72 = tpu.reciprocal %71 : vector<8x1xf32> -> vector<8x1xf32>
    %73 = vector.broadcast %72 : vector<8x1xf32> to vector<8x8xf32>
    %74 = arith.mulf %69, %73 : vector<8x8xf32>
    %c0_33 = arith.constant 0 : index
    %c1 = arith.constant 1 : index
    %c0_34 = arith.constant 0 : index
    %c0_35 = arith.constant 0 : index
    %75 = vector.load %arg15[%c0_33, %c1, %c0_34, %c0_35] : memref<1x4x8x8xf32, #tpu.memory_space<vmem>>, vector<1x1x8x8xf32>
    %76 = vector.shape_cast %75 : vector<1x1x8x8xf32> to vector<8x8xf32>
    %77 = vector.shape_cast %74 : vector<8x8xf32> to vector<1x1x8x8xf32>
    tpu.vector_store %arg15[%c0_33, %c1, %c0_34, %c0_35], %77 {strides = array<i32>} : memref<1x4x8x8xf32, #tpu.memory_space<vmem>>, vector<1x1x8x8xf32>,
    %78 = arith.truncf %69 : vector<8x8xf32> to vector<8x8xbf16>
    %cst_36 = arith.constant dense<0.000000e+00> : vector<8x8xf32>
    %79 = tpu.matmul %78, %63, %cst_36 {dimension_numbers = #tpu.dot_dimension_numbers<[1], [0], [0], [1], [0, 0, 1, 1], [], []>} : vector<8x8xbf16>, vector<8x8xbf16>, vector<8x8xf32> -> vector<8x8xf32>
    %80 = vector.broadcast %72 : vector<8x1xf32> to vector<8x8xf32>
    %81 = arith.mulf %79, %80 : vector<8x8xf32>
    %82 = arith.truncf %81 : vector<8x8xf32> to vector<8x8xbf16>
    %83 = vector.extract_strided_slice %14 {offsets = [0, 16], sizes = [8, 8], strides = [1, 1]} : vector<8x32xf32> to vector<8x8xf32>
    %84 = arith.truncf %83 : vector<8x8xf32> to vector<8x8xbf16>
    %85 = vector.extract_strided_slice %23 {offsets = [0, 16], sizes = [8, 8], strides = [1, 1]} : vector<8x32xf32> to vector<8x8xf32>
    %86 = arith.truncf %85 : vector<8x8xf32> to vector<8x8xbf16>
    %87 = vector.extract_strided_slice %32 {offsets = [0, 16], sizes = [8, 8], strides = [1, 1]} : vector<8x32xf32> to vector<8x8xf32>
    %88 = arith.truncf %87 : vector<8x8xf32> to vector<8x8xbf16>
    %cst_37 = arith.constant dense<0.000000e+00> : vector<8x8xf32>
    %89 = tpu.matmul %84, %86, %cst_37 {dimension_numbers = #tpu.dot_dimension_numbers<[1], [1], [0], [0], [0, 0, 1, 0], [], []>} : vector<8x8xbf16>, vector<8x8xbf16>, vector<8x8xf32> -> vector<8x8xf32>
    %cst_38 = arith.constant dense<0xFF800000> : vector<8xf32>
    %90 = vector.multi_reduction <maximumf>, %89, %cst_38 [1] : vector<8x8xf32> to vector<8xf32>
    %91 = vector.shape_cast %90 : vector<8xf32> to vector<8x1xf32>
    %92 = vector.broadcast %91 : vector<8x1xf32> to vector<8x8xf32>
    %93 = arith.subf %89, %92 : vector<8x8xf32>
    %94 = math.exp %93 : vector<8x8xf32>
    %cst_39 = arith.constant dense<0.000000e+00> : vector<8xf32>
    %95 = vector.multi_reduction <add>, %94, %cst_39 [1] : vector<8x8xf32> to vector<8xf32>
    %96 = vector.shape_cast %95 : vector<8xf32> to vector<8x1xf32>
    %97 = tpu.reciprocal %96 : vector<8x1xf32> -> vector<8x1xf32>
    %98 = vector.broadcast %97 : vector<8x1xf32> to vector<8x8xf32>
    %99 = arith.mulf %94, %98 : vector<8x8xf32>
    %c0_40 = arith.constant 0 : index
    %c2 = arith.constant 2 : index
    %c0_41 = arith.constant 0 : index
    %c0_42 = arith.constant 0 : index
    %100 = vector.load %arg15[%c0_40, %c2, %c0_41, %c0_42] : memref<1x4x8x8xf32, #tpu.memory_space<vmem>>, vector<1x1x8x8xf32>
    %101 = vector.shape_cast %100 : vector<1x1x8x8xf32> to vector<8x8xf32>
    %102 = vector.shape_cast %99 : vector<8x8xf32> to vector<1x1x8x8xf32>
    tpu.vector_store %arg15[%c0_40, %c2, %c0_41, %c0_42], %102 {strides = array<i32>} : memref<1x4x8x8xf32, #tpu.memory_space<vmem>>, vector<1x1x8x8xf32>,
    %103 = arith.truncf %94 : vector<8x8xf32> to vector<8x8xbf16>
    %cst_43 = arith.constant dense<0.000000e+00> : vector<8x8xf32>
    %104 = tpu.matmul %103, %88, %cst_43 {dimension_numbers = #tpu.dot_dimension_numbers<[1], [0], [0], [1], [0, 0, 1, 1], [], []>} : vector<8x8xbf16>, vector<8x8xbf16>, vector<8x8xf32> -> vector<8x8xf32>
    %105 = vector.broadcast %97 : vector<8x1xf32> to vector<8x8xf32>
    %106 = arith.mulf %104, %105 : vector<8x8xf32>
    %107 = arith.truncf %106 : vector<8x8xf32> to vector<8x8xbf16>
    %108 = vector.extract_strided_slice %14 {offsets = [0, 24], sizes = [8, 8], strides = [1, 1]} : vector<8x32xf32> to vector<8x8xf32>
    %109 = arith.truncf %108 : vector<8x8xf32> to vector<8x8xbf16>
    %110 = vector.extract_strided_slice %23 {offsets = [0, 24], sizes = [8, 8], strides = [1, 1]} : vector<8x32xf32> to vector<8x8xf32>
    %111 = arith.truncf %110 : vector<8x8xf32> to vector<8x8xbf16>
    %112 = vector.extract_strided_slice %32 {offsets = [0, 24], sizes = [8, 8], strides = [1, 1]} : vector<8x32xf32> to vector<8x8xf32>
    %113 = arith.truncf %112 : vector<8x8xf32> to vector<8x8xbf16>
    %cst_44 = arith.constant dense<0.000000e+00> : vector<8x8xf32>
    %114 = tpu.matmul %109, %111, %cst_44 {dimension_numbers = #tpu.dot_dimension_numbers<[1], [1], [0], [0], [0, 0, 1, 0], [], []>} : vector<8x8xbf16>, vector<8x8xbf16>, vector<8x8xf32> -> vector<8x8xf32>
    %cst_45 = arith.constant dense<0xFF800000> : vector<8xf32>
    %115 = vector.multi_reduction <maximumf>, %114, %cst_45 [1] : vector<8x8xf32> to vector<8xf32>
    %116 = vector.shape_cast %115 : vector<8xf32> to vector<8x1xf32>
    %117 = vector.broadcast %116 : vector<8x1xf32> to vector<8x8xf32>
    %118 = arith.subf %114, %117 : vector<8x8xf32>
    %119 = math.exp %118 : vector<8x8xf32>
    %cst_46 = arith.constant dense<0.000000e+00> : vector<8xf32>
    %120 = vector.multi_reduction <add>, %119, %cst_46 [1] : vector<8x8xf32> to vector<8xf32>
    %121 = vector.shape_cast %120 : vector<8xf32> to vector<8x1xf32>
    %122 = tpu.reciprocal %121 : vector<8x1xf32> -> vector<8x1xf32>
    %123 = vector.broadcast %122 : vector<8x1xf32> to vector<8x8xf32>
    %124 = arith.mulf %119, %123 : vector<8x8xf32>
    %c0_47 = arith.constant 0 : index
    %c3 = arith.constant 3 : index
    %c0_48 = arith.constant 0 : index
    %c0_49 = arith.constant 0 : index
    %125 = vector.load %arg15[%c0_47, %c3, %c0_48, %c0_49] : memref<1x4x8x8xf32, #tpu.memory_space<vmem>>, vector<1x1x8x8xf32>
    %126 = vector.shape_cast %125 : vector<1x1x8x8xf32> to vector<8x8xf32>
    %127 = vector.shape_cast %124 : vector<8x8xf32> to vector<1x1x8x8xf32>
    tpu.vector_store %arg15[%c0_47, %c3, %c0_48, %c0_49], %127 {strides = array<i32>} : memref<1x4x8x8xf32, #tpu.memory_space<vmem>>, vector<1x1x8x8xf32>,
    %128 = arith.truncf %119 : vector<8x8xf32> to vector<8x8xbf16>
    %cst_50 = arith.constant dense<0.000000e+00> : vector<8x8xf32>
    %129 = tpu.matmul %128, %113, %cst_50 {dimension_numbers = #tpu.dot_dimension_numbers<[1], [0], [0], [1], [0, 0, 1, 1], [], []>} : vector<8x8xbf16>, vector<8x8xbf16>, vector<8x8xf32> -> vector<8x8xf32>
    %130 = vector.broadcast %122 : vector<8x1xf32> to vector<8x8xf32>
    %131 = arith.mulf %129, %130 : vector<8x8xf32>
    %132 = arith.truncf %131 : vector<8x8xf32> to vector<8x8xbf16>
    %133 = tpu.concatenate %57, %82, %107, %132 in 1 : vector<8x8xbf16>, vector<8x8xbf16>, vector<8x8xbf16>, vector<8x8xbf16> -> vector<8x32xbf16>
    %134 = arith.index_cast %arg2 : i32 to index
    %c0_51 = arith.constant 0 : index
    %c0_52 = arith.constant 0 : index
    %135 = vector.load %arg12[%134, %c0_51, %c0_52] : memref<1x32x32xbf16, #tpu.memory_space<vmem>>, vector<1x32x32xbf16>
    %136 = vector.shape_cast %135 : vector<1x32x32xbf16> to vector<32x32xbf16>
    %cst_53 = arith.constant dense<0.000000e+00> : vector<8x32xf32>
    %137 = tpu.matmul %133, %136, %cst_53 {dimension_numbers = #tpu.dot_dimension_numbers<[1], [0], [0], [1], [0, 0, 1, 1], [], []>} : vector<8x32xbf16>, vector<32x32xbf16>, vector<8x32xf32> -> vector<8x32xf32>
    %c0_i32 = arith.constant 0 : i32
    %138 = arith.cmpi eq, %arg2, %c0_i32 : i32
    %139 = arith.extui %138 : i1 to i32
    %c0_i32_54 = arith.constant 0 : i32
    %140 = arith.cmpi ne, %139, %c0_i32_54 : i32
    scf.if %140 {
      %c0_57 = arith.constant 0 : index
      %c0_58 = arith.constant 0 : index
      %144 = vector.load %arg13[%c0_57, %c0_58] : memref<1x32xf32, #tpu.memory_space<vmem>>, vector<1x32xf32>
      %145 = vector.broadcast %144 : vector<1x32xf32> to vector<8x32xf32>
      %146 = arith.addf %137, %145 : vector<8x32xf32>
      %c0_59 = arith.constant 0 : index
      %c0_60 = arith.constant 0 : index
      %c0_61 = arith.constant 0 : index
      %147 = vector.load %arg14[%c0_59, %c0_60, %c0_61] : memref<1x8x32xf32, #tpu.memory_space<vmem>>, vector<1x8x32xf32>
      %148 = vector.shape_cast %147 : vector<1x8x32xf32> to vector<8x32xf32>
      %149 = vector.shape_cast %146 : vector<8x32xf32> to vector<1x8x32xf32>
      tpu.vector_store %arg14[%c0_59, %c0_60, %c0_61], %149 {strides = array<i32>} : memref<1x8x32xf32, #tpu.memory_space<vmem>>, vector<1x8x32xf32>,
    } else {
    }
    %c0_i32_55 = arith.constant 0 : i32
    %141 = arith.cmpi sgt, %arg2, %c0_i32_55 : i32
    %142 = arith.extui %141 : i1 to i32
    %c0_i32_56 = arith.constant 0 : i32
    %143 = arith.cmpi ne, %142, %c0_i32_56 : i32
    scf.if %143 {
      %c0_57 = arith.constant 0 : index
      %c0_58 = arith.constant 0 : index
      %c0_59 = arith.constant 0 : index
      %144 = vector.load %arg14[%c0_57, %c0_58, %c0_59] : memref<1x8x32xf32, #tpu.memory_space<vmem>>, vector<1x8x32xf32>
      %145 = vector.shape_cast %144 : vector<1x8x32xf32> to vector<8x32xf32>
      %146 = arith.addf %145, %137 : vector<8x32xf32>
      %c0_60 = arith.constant 0 : index
      %c0_61 = arith.constant 0 : index
      %c0_62 = arith.constant 0 : index
      %147 = vector.load %arg14[%c0_60, %c0_61, %c0_62] : memref<1x8x32xf32, #tpu.memory_space<vmem>>, vector<1x8x32xf32>
      %148 = vector.shape_cast %147 : vector<1x8x32xf32> to vector<8x32xf32>
      %149 = vector.shape_cast %146 : vector<8x32xf32> to vector<1x8x32xf32>
      tpu.vector_store %arg14[%c0_60, %c0_61, %c0_62], %149 {strides = array<i32>} : memref<1x8x32xf32, #tpu.memory_space<vmem>>, vector<1x8x32xf32>,
    } else {
    }
    return
  }
  func.func @transform_0(%arg0: i32, %arg1: i32, %arg2: i32) -> (i32, i32, i32) {
    %c0_i32 = arith.constant 0 : i32
    %c0_i32_0 = arith.constant 0 : i32
    return %arg0, %arg1, %c0_i32 : i32, i32, i32
  }
  func.func @transform_1(%arg0: i32, %arg1: i32, %arg2: i32) -> (i32, i32, i32) {
    %c0_i32 = arith.constant 0 : i32
    %c0_i32_0 = arith.constant 0 : i32
    %c0_i32_1 = arith.constant 0 : i32
    return %arg0, %c0_i32, %c0_i32_0 : i32, i32, i32
  }
  func.func @transform_2(%arg0: i32, %arg1: i32, %arg2: i32) -> (i32, i32, i32) {
    %c0_i32 = arith.constant 0 : i32
    %c0_i32_0 = arith.constant 0 : i32
    %c0_i32_1 = arith.constant 0 : i32
    return %arg0, %c0_i32, %c0_i32_0 : i32, i32, i32
  }
  func.func @transform_3(%arg0: i32, %arg1: i32, %arg2: i32) -> (i32, i32, i32) {
    %c0_i32 = arith.constant 0 : i32
    %c0_i32_0 = arith.constant 0 : i32
    %c0_i32_1 = arith.constant 0 : i32
    %c0_i32_2 = arith.constant 0 : i32
    return %c0_i32, %c0_i32_0, %c0_i32_1 : i32, i32, i32
  }
  func.func @transform_4(%arg0: i32, %arg1: i32, %arg2: i32) -> (i32, i32, i32) {
    %c0_i32 = arith.constant 0 : i32
    %c0_i32_0 = arith.constant 0 : i32
    %c0_i32_1 = arith.constant 0 : i32
    %c0_i32_2 = arith.constant 0 : i32
    return %c0_i32, %c0_i32_0, %c0_i32_1 : i32, i32, i32
  }
  func.func @transform_5(%arg0: i32, %arg1: i32, %arg2: i32) -> (i32, i32, i32) {
    %c0_i32 = arith.constant 0 : i32
    %c0_i32_0 = arith.constant 0 : i32
    %c0_i32_1 = arith.constant 0 : i32
    %c0_i32_2 = arith.constant 0 : i32
    return %c0_i32, %c0_i32_0, %c0_i32_1 : i32, i32, i32
  }
  func.func @transform_6(%arg0: i32, %arg1: i32, %arg2: i32) -> (i32, i32, i32) {
    %c0_i32 = arith.constant 0 : i32
    %c0_i32_0 = arith.constant 0 : i32
    %c0_i32_1 = arith.constant 0 : i32
    %c0_i32_2 = arith.constant 0 : i32
    return %c0_i32, %c0_i32_0, %c0_i32_1 : i32, i32, i32
  }
  func.func @transform_7(%arg0: i32, %arg1: i32, %arg2: i32) -> (i32, i32, i32) {
    %c0_i32 = arith.constant 0 : i32
    %c0_i32_0 = arith.constant 0 : i32
    %c0_i32_1 = arith.constant 0 : i32
    %c0_i32_2 = arith.constant 0 : i32
    return %c0_i32, %c0_i32_0, %c0_i32_1 : i32, i32, i32
  }
  func.func @transform_8(%arg0: i32, %arg1: i32, %arg2: i32) -> (i32, i32, i32) {
    %c0_i32 = arith.constant 0 : i32
    %c0_i32_0 = arith.constant 0 : i32
    %c0_i32_1 = arith.constant 0 : i32
    %c0_i32_2 = arith.constant 0 : i32
    return %c0_i32, %c0_i32_0, %c0_i32_1 : i32, i32, i32
  }
  func.func @transform_9(%arg0: i32, %arg1: i32, %arg2: i32) -> (i32, i32, i32) {
    %c0_i32 = arith.constant 0 : i32
    %c0_i32_0 = arith.constant 0 : i32
    %c0_i32_1 = arith.constant 0 : i32
    %c0_i32_2 = arith.constant 0 : i32
    return %c0_i32, %c0_i32_0, %c0_i32_1 : i32, i32, i32
  }
  func.func @transform_10(%arg0: i32, %arg1: i32, %arg2: i32) -> (i32, i32) {
    %c0_i32 = arith.constant 0 : i32
    %c0_i32_0 = arith.constant 0 : i32
    %c0_i32_1 = arith.constant 0 : i32
    return %c0_i32, %c0_i32_0 : i32, i32
  }
  func.func @transform_11(%arg0: i32, %arg1: i32, %arg2: i32) -> (i32, i32, i32) {
    %c0_i32 = arith.constant 0 : i32
    %c0_i32_0 = arith.constant 0 : i32
    return %arg0, %arg1, %c0_i32 : i32, i32, i32
  }
  func.func @transform_12(%arg0: i32, %arg1: i32, %arg2: i32) -> (i32, i32, i32, i32) {
    %c0_i32 = arith.constant 0 : i32
    %c0_i32_0 = arith.constant 0 : i32
    return %arg0, %arg2, %arg1, %c0_i32 : i32, i32, i32, i32
  }
}

</mosaic_0001>

<llo_original>
// kernel: tpu_custom_call.1
$region0: #{tpu_custom_call.1}
  #allocation0 [shape = 'u32[]', space=smem, size = 0x4, offset = 0x4, fixed_abs, tag = 'smem constant byte address 0x4 - core index']
  #allocation1 [shape = 'u32[144,128]{1,0:T(1,128)}', space=vmem, size = 0x12000, scoped, tag = 'internal scratch']
  %s0 = inlined_call_operand.hbm [shape: bf16[2,8,32], index: 0, kind: input, shape index: {}]
  %s1 = inlined_call_operand.hbm [shape: bf16[2,8,32], index: 1, kind: input, shape index: {}]
  %s2 = inlined_call_operand.hbm [shape: bf16[2,8,32], index: 2, kind: input, shape index: {}]
  %s3 = inlined_call_operand.hbm [shape: bf16[1,32,32], index: 3, kind: input, shape index: {}]
  %s4 = inlined_call_operand.hbm [shape: f32[1,1,32], index: 4, kind: input, shape index: {}]
  %s5 = inlined_call_operand.hbm [shape: bf16[1,32,32], index: 5, kind: input, shape index: {}]
  %s6 = inlined_call_operand.hbm [shape: f32[1,1,32], index: 6, kind: input, shape index: {}]
  %s7 = inlined_call_operand.hbm [shape: bf16[1,32,32], index: 7, kind: input, shape index: {}]
  %s8 = inlined_call_operand.hbm [shape: f32[1,1,32], index: 8, kind: input, shape index: {}]
  %s9 = inlined_call_operand.vmem [shape: bf16[1,32,32], index: 9, kind: input, shape index: {}]
  %s10 = inlined_call_operand.vmem [shape: f32[1,32], index: 10, kind: input, shape index: {}]
  %s11 = inlined_call_operand.hbm [shape: f32[2,8,32], index: 11, kind: output, shape index: {0}]
  %s12 = inlined_call_operand.hbm [shape: f32[2,4,8,8], index: 12, kind: output, shape index: {1}]
  %13 = xla_tuple %s11, %s12
  %s14 = sld [smem:[#allocation0]]
  $region129: #{tpu_custom_call.1} parent=0
    _
  %s16 = ssub.s32 1, %s14
  %s17 = scalar_select 0, %s16, %s14
  $region1: #{tpu_custom_call.1} parent=0
    #allocation2 [shape = 'u8[4096]{0}', space=vmem, size = 0x1000, scoped, tag = 'input window, operand 0']
    #allocation3 [shape = 's32[2]{0}', space=sflag, size = 0x8, scoped, tag = 'scoped memory for tpu_custom_call.1']
    #allocation4 [shape = 's32[2]{0}', space=sflag, size = 0x8, scoped, tag = 'scoped memory for tpu_custom_call.1']
    #allocation5 [shape = 'u8[4096]{0}', space=vmem, size = 0x1000, scoped, tag = 'input window, operand 1']
    #allocation6 [shape = 's32[2]{0}', space=sflag, size = 0x8, scoped, tag = 'scoped memory for tpu_custom_call.1']
    #allocation7 [shape = 'u8[4096]{0}', space=vmem, size = 0x1000, scoped, tag = 'input window, operand 2']
    #allocation8 [shape = 'u8[8192]{0}', space=vmem, size = 0x2000, scoped, tag = 'input window, operand 3, single buffered']
    #allocation9 [shape = 's32[1]{0}', space=sflag, size = 0x4, scoped, tag = 'scoped memory for tpu_custom_call.1']
    #allocation10 [shape = 'u8[512]{0}', space=vmem, size = 0x400, scoped, tag = 'input window, operand 4, single buffered']
    #allocation11 [shape = 'u8[8192]{0}', space=vmem, size = 0x2000, scoped, tag = 'input window, operand 5, single buffered']
    #allocation12 [shape = 's32[1]{0}', space=sflag, size = 0x4, scoped, tag = 'scoped memory for tpu_custom_call.1']
    #allocation13 [shape = 'u8[512]{0}', space=vmem, size = 0x400, scoped, tag = 'input window, operand 6, single buffered']
    #allocation14 [shape = 'u8[8192]{0}', space=vmem, size = 0x2000, scoped, tag = 'input window, operand 7, single buffered']
    #allocation15 [shape = 's32[1]{0}', space=sflag, size = 0x4, scoped, tag = 'scoped memory for tpu_custom_call.1']
    #allocation16 [shape = 'u8[512]{0}', space=vmem, size = 0x400, scoped, tag = 'input window, operand 8, single buffered']
    #allocation17 [shape = 'u8[8192]{0}', space=vmem, size = 0x2000, scoped, tag = 'output window, operand 0']
    #allocation18 [shape = 'u8[32768]{0}', space=vmem, size = 0x8000, scoped, tag = 'output window, operand 1']
    #allocation19 [shape = 's32[2]{0}', space=sflag, size = 0x8, scoped, tag = 'scoped memory for tpu_custom_call.1']
    %18 = vsyncpa [#allocation3], 0
    %s19 = scalar_lea.sflag [#allocation3], 1
    %20 = vsyncpa %s19, 0
    %21 = vsyncpa [#allocation6], 0
    %s22 = scalar_lea.sflag [#allocation6], 1
    %23 = vsyncpa %s22, 0
    %24 = vsyncpa [#allocation9], 0
    %25 = vsyncpa [#allocation12], 0
    %26 = vsyncpa [#allocation15], 0
    %27 = vsyncpa [#allocation4], 0
    %s28 = scalar_lea.sflag [#allocation4], 1
    %29 = vsyncpa %s28, 0
    %30 = vsyncpa [#allocation19], 0
    %s31 = scalar_lea.sflag [#allocation19], 1
    %32 = vsyncpa %s31, 0
    loop: start=0, step=1, limit=4
    $region2: #{tpu_custom_call.1} parent=1 // loop_pre_header
      _
    $region3: #{tpu_custom_call.1} parent=1 // loop_header
      %s34 = sphi 0, %s38
      %p35 = scmp.ge.s32.totalorder %s34, 4
      %s41 = sphi 0, %s60
      %s42 = sphi 0, %s56
      %s43 = sphi 0, %s52
      %s44 = sphi 0, %s41
      %s45 = sphi 0, %s42
      %s46 = sphi 0, %s43
      %s47 = sphi 0, %s44
      %s48 = sphi 0, %s45
      %s49 = sphi 0, %s46
      %s65 = sphi 0, %s67
      %s68 = sphi 0, %s65
      %s69 = sphi 0, %s68
      %s85 = sphi 0, %s69
      %s91 = sphi 0, %s93
      %s94 = sphi 0, %s91
      %s95 = sphi 0, %s94
      %s111 = sphi 0, %s95
      %s117 = sphi 0, %s119
      %s120 = sphi 0, %s117
      %s121 = sphi 0, %s120
      %s137 = sphi 0, %s121
      %s141 = sphi 0, %s141
      %s143 = sphi 0, %s141
      %s144 = sphi 0, %s143
      %s158 = sphi 0, %s144
      %s162 = sphi 0, %s162
      %s164 = sphi 0, %s162
      %s165 = sphi 0, %s164
      %s179 = sphi 0, %s165
      %s183 = sphi 0, %s183
      %s185 = sphi 0, %s183
      %s186 = sphi 0, %s185
      %s200 = sphi 0, %s186
      %s204 = sphi 0, %s204
      %s206 = sphi 0, %s204
      %s207 = sphi 0, %s206
      %s221 = sphi 0, %s207
      %s225 = sphi 0, %s225
      %s227 = sphi 0, %s225
      %s228 = sphi 0, %s227
      %s242 = sphi 0, %s228
      %s246 = sphi 0, %s246
      %s248 = sphi 0, %s246
      %s249 = sphi 0, %s248
      %s263 = sphi 0, %s249
      %s267 = sphi 0, %s267
      %s269 = sphi 0, %s267
      %s270 = sphi 0, %s269
      %s284 = sphi 0, %s270
      %s288 = sphi 0, %s288
      %s290 = sphi 0, %s288
      %s291 = sphi 0, %s290
      %s305 = sphi 0, %s291
      %s313 = sphi 0, %s315
      %s316 = sphi 0, %s313
      %s317 = sphi 0, %s316
      %s333 = sphi 0, %s317
      %s343 = sphi 0, %s345
      %s346 = sphi 0, %s343
      %s347 = sphi 0, %s346
      %s363 = sphi 0, %s347
    $region4: #{tpu_custom_call.1} parent=1 // loop_header_branch
      %37 = sbr.rel (%p35) target = $region8
    $region5: #{tpu_custom_call.1} parent=1 // loop_body
      %s39 = ssub.s32 %s34, 1
      %s40 = ssub.s32 %s34, 2
      %s50 = sadd.s32 1, %s43
      %p51 = scmp.ge.s32.totalorder %s50, 1
      %s52 = scalar_select %p51, 0, %s50
      %s53 = sadd.s32 1, %s42
      %s54 = scalar_select %p51, %s53, %s42
      %p55 = scmp.ge.s32.totalorder %s54, 1
      %s56 = scalar_select %p55, 0, %s54
      %s57 = sadd.s32 1, %s41
      %s58 = scalar_select %p55, %s57, %s41
      %p59 = scmp.ge.s32.totalorder %s58, 2
      %s60 = scalar_select %p59, 0, %s58
      %s61 = ssub.s32 %s41, %s60
      %s62 = ssub.s32 %s42, %s56
      %s63 = sor.u32 %s61, %s62
      %p64 = scmp.eq.s32.totalorder %s63, 0
      %s66 = sadd.s32 %s65, 1
      %s67 = scalar_select %p64, %s65, %s66
      %p70 = pneg %p64
      %p71 = scmp.eq.s32.totalorder %s34, 1
      %p72 = por %p70, %p71
      %p73 = scmp.ne.s32.totalorder %s65, %s68
      %p74 = scmp.eq.s32.totalorder %s34, 0
      %p75 = por %p73, %p74
      %p76 = scmp.ne.s32.totalorder %s65, %s68
      %p77 = scmp.eq.s32.totalorder %s39, 1
      %p78 = por %p76, %p77
      %p79 = scmp.ne.s32.totalorder %s68, %s69
      %p80 = scmp.eq.s32.totalorder %s39, 0
      %p81 = por %p79, %p80
      %p82 = scmp.ne.s32.totalorder %s68, %s69
      %p83 = scmp.eq.s32.totalorder %s40, 1
      %p84 = por %p82, %p83
      %p86 = scmp.ne.s32.totalorder %s69, %s85
      %p87 = scmp.eq.s32.totalorder %s40, 0
      %p88 = por %p86, %p87
      %s89 = ssub.s32 %s41, %s60
      %p90 = scmp.eq.s32.totalorder %s89, 0
      %s92 = sadd.s32 %s91, 1
      %s93 = scalar_select %p90, %s91, %s92
      %p96 = pneg %p90
      %p97 = scmp.eq.s32.totalorder %s34, 1
      %p98 = por %p96, %p97
      %p99 = scmp.ne.s32.totalorder %s91, %s94
      %p100 = scmp.eq.s32.totalorder %s34, 0
      %p101 = por %p99, %p100
      %p102 = scmp.ne.s32.totalorder %s91, %s94
      %p103 = scmp.eq.s32.totalorder %s39, 1
      %p104 = por %p102, %p103
      %p105 = scmp.ne.s32.totalorder %s94, %s95
      %p106 = scmp.eq.s32.totalorder %s39, 0
      %p107 = por %p105, %p106
      %p108 = scmp.ne.s32.totalorder %s94, %s95
      %p109 = scmp.eq.s32.totalorder %s40, 1
      %p110 = por %p108, %p109
      %p112 = scmp.ne.s32.totalorder %s95, %s111
      %p113 = scmp.eq.s32.totalorder %s40, 0
      %p114 = por %p112, %p113
      %s115 = ssub.s32 %s41, %s60
      %p116 = scmp.eq.s32.totalorder %s115, 0
      %s118 = sadd.s32 %s117, 1
      %s119 = scalar_select %p116, %s117, %s118
      %p122 = pneg %p116
      %p123 = scmp.eq.s32.totalorder %s34, 1
      %p124 = por %p122, %p123
      %p125 = scmp.ne.s32.totalorder %s117, %s120
      %p126 = scmp.eq.s32.totalorder %s34, 0
      %p127 = por %p125, %p126
      %p128 = scmp.ne.s32.totalorder %s117, %s120
      %p129 = scmp.eq.s32.totalorder %s39, 1
      %p130 = por %p128, %p129
      %p131 = scmp.ne.s32.totalorder %s120, %s121
      %p132 = scmp.eq.s32.totalorder %s39, 0
      %p133 = por %p131, %p132
      %p134 = scmp.ne.s32.totalorder %s120, %s121
      %p135 = scmp.eq.s32.totalorder %s40, 1
      %p136 = por %p134, %p135
      %p138 = scmp.ne.s32.totalorder %s121, %s137
      %p139 = scmp.eq.s32.totalorder %s40, 0
      %p140 = por %p138, %p139
      %s142 = sadd.s32 %s141, 1
      %p145 = scmp.eq.s32.totalorder %s34, 1
      %p146 = scmp.ne.s32.totalorder %s141, %s143
      %p147 = scmp.eq.s32.totalorder %s34, 0
      %p148 = por %p146, %p147
      %p149 = scmp.ne.s32.totalorder %s141, %s143
      %p150 = scmp.eq.s32.totalorder %s39, 1
      %p151 = por %p149, %p150
      %p152 = scmp.ne.s32.totalorder %s143, %s144
      %p153 = scmp.eq.s32.totalorder %s39, 0
      %p154 = por %p152, %p153
      %p155 = scmp.ne.s32.totalorder %s143, %s144
      %p156 = scmp.eq.s32.totalorder %s40, 1
      %p157 = por %p155, %p156
      %p159 = scmp.ne.s32.totalorder %s144, %s158
      %p160 = scmp.eq.s32.totalorder %s40, 0
      %p161 = por %p159, %p160
      %s163 = sadd.s32 %s162, 1
      %p166 = scmp.eq.s32.totalorder %s34, 1
      %p167 = scmp.ne.s32.totalorder %s162, %s164
      %p168 = scmp.eq.s32.totalorder %s34, 0
      %p169 = por %p167, %p168
      %p170 = scmp.ne.s32.totalorder %s162, %s164
      %p171 = scmp.eq.s32.totalorder %s39, 1
      %p172 = por %p170, %p171
      %p173 = scmp.ne.s32.totalorder %s164, %s165
      %p174 = scmp.eq.s32.totalorder %s39, 0
      %p175 = por %p173, %p174
      %p176 = scmp.ne.s32.totalorder %s164, %s165
      %p177 = scmp.eq.s32.totalorder %s40, 1
      %p178 = por %p176, %p177
      %p180 = scmp.ne.s32.totalorder %s165, %s179
      %p181 = scmp.eq.s32.totalorder %s40, 0
      %p182 = por %p180, %p181
      %s184 = sadd.s32 %s183, 1
      %p187 = scmp.eq.s32.totalorder %s34, 1
      %p188 = scmp.ne.s32.totalorder %s183, %s185
      %p189 = scmp.eq.s32.totalorder %s34, 0
      %p190 = por %p188, %p189
      %p191 = scmp.ne.s32.totalorder %s183, %s185
      %p192 = scmp.eq.s32.totalorder %s39, 1
      %p193 = por %p191, %p192
      %p194 = scmp.ne.s32.totalorder %s185, %s186
      %p195 = scmp.eq.s32.totalorder %s39, 0
      %p196 = por %p194, %p195
      %p197 = scmp.ne.s32.totalorder %s185, %s186
      %p198 = scmp.eq.s32.totalorder %s40, 1
      %p199 = por %p197, %p198
      %p201 = scmp.ne.s32.totalorder %s186, %s200
      %p202 = scmp.eq.s32.totalorder %s40, 0
      %p203 = por %p201, %p202
      %s205 = sadd.s32 %s204, 1
      %p208 = scmp.eq.s32.totalorder %s34, 1
      %p209 = scmp.ne.s32.totalorder %s204, %s206
      %p210 = scmp.eq.s32.totalorder %s34, 0
      %p211 = por %p209, %p210
      %p212 = scmp.ne.s32.totalorder %s204, %s206
      %p213 = scmp.eq.s32.totalorder %s39, 1
      %p214 = por %p212, %p213
      %p215 = scmp.ne.s32.totalorder %s206, %s207
      %p216 = scmp.eq.s32.totalorder %s39, 0
      %p217 = por %p215, %p216
      %p218 = scmp.ne.s32.totalorder %s206, %s207
      %p219 = scmp.eq.s32.totalorder %s40, 1
      %p220 = por %p218, %p219
      %p222 = scmp.ne.s32.totalorder %s207, %s221
      %p223 = scmp.eq.s32.totalorder %s40, 0
      %p224 = por %p222, %p223
      %s226 = sadd.s32 %s225, 1
      %p229 = scmp.eq.s32.totalorder %s34, 1
      %p230 = scmp.ne.s32.totalorder %s225, %s227
      %p231 = scmp.eq.s32.totalorder %s34, 0
      %p232 = por %p230, %p231
      %p233 = scmp.ne.s32.totalorder %s225, %s227
      %p234 = scmp.eq.s32.totalorder %s39, 1
      %p235 = por %p233, %p234
      %p236 = scmp.ne.s32.totalorder %s227, %s228
      %p237 = scmp.eq.s32.totalorder %s39, 0
      %p238 = por %p236, %p237
      %p239 = scmp.ne.s32.totalorder %s227, %s228
      %p240 = scmp.eq.s32.totalorder %s40, 1
      %p241 = por %p239, %p240
      %p243 = scmp.ne.s32.totalorder %s228, %s242
      %p244 = scmp.eq.s32.totalorder %s40, 0
      %p245 = por %p243, %p244
      %s247 = sadd.s32 %s246, 1
      %p250 = scmp.eq.s32.totalorder %s34, 1
      %p251 = scmp.ne.s32.totalorder %s246, %s248
      %p252 = scmp.eq.s32.totalorder %s34, 0
      %p253 = por %p251, %p252
      %p254 = scmp.ne.s32.totalorder %s246, %s248
      %p255 = scmp.eq.s32.totalorder %s39, 1
      %p256 = por %p254, %p255
      %p257 = scmp.ne.s32.totalorder %s248, %s249
      %p258 = scmp.eq.s32.totalorder %s39, 0
      %p259 = por %p257, %p258
      %p260 = scmp.ne.s32.totalorder %s248, %s249
      %p261 = scmp.eq.s32.totalorder %s40, 1
      %p262 = por %p260, %p261
      %p264 = scmp.ne.s32.totalorder %s249, %s263
      %p265 = scmp.eq.s32.totalorder %s40, 0
      %p266 = por %p264, %p265
      %s268 = sadd.s32 %s267, 1
      %p271 = scmp.eq.s32.totalorder %s34, 1
      %p272 = scmp.ne.s32.totalorder %s267, %s269
      %p273 = scmp.eq.s32.totalorder %s34, 0
      %p274 = por %p272, %p273
      %p275 = scmp.ne.s32.totalorder %s267, %s269
      %p276 = scmp.eq.s32.totalorder %s39, 1
      %p277 = por %p275, %p276
      %p278 = scmp.ne.s32.totalorder %s269, %s270
      %p279 = scmp.eq.s32.totalorder %s39, 0
      %p280 = por %p278, %p279
      %p281 = scmp.ne.s32.totalorder %s269, %s270
      %p282 = scmp.eq.s32.totalorder %s40, 1
      %p283 = por %p281, %p282
      %p285 = scmp.ne.s32.totalorder %s270, %s284
      %p286 = scmp.eq.s32.totalorder %s40, 0
      %p287 = por %p285, %p286
      %s289 = sadd.s32 %s288, 1
      %p292 = scmp.eq.s32.totalorder %s34, 1
      %p293 = scmp.ne.s32.totalorder %s288, %s290
      %p294 = scmp.eq.s32.totalorder %s34, 0
      %p295 = por %p293, %p294
      %p296 = scmp.ne.s32.totalorder %s288, %s290
      %p297 = scmp.eq.s32.totalorder %s39, 1
      %p298 = por %p296, %p297
      %p299 = scmp.ne.s32.totalorder %s290, %s291
      %p300 = scmp.eq.s32.totalorder %s39, 0
      %p301 = por %p299, %p300
      %p302 = scmp.ne.s32.totalorder %s290, %s291
      %p303 = scmp.eq.s32.totalorder %s40, 1
      %p304 = por %p302, %p303
      %p306 = scmp.ne.s32.totalorder %s291, %s305
      %p307 = scmp.eq.s32.totalorder %s40, 0
      %p308 = por %p306, %p307
      %s309 = ssub.s32 %s41, %s60
      %s310 = ssub.s32 %s42, %s56
      %s311 = sor.u32 %s309, %s310
      %p312 = scmp.eq.s32.totalorder %s311, 0
      %s314 = sadd.s32 %s313, 1
      %s315 = scalar_select %p312, %s313, %s314
      %p318 = pneg %p312
      %p319 = scmp.eq.s32.totalorder %s34, 1
      %p320 = por %p318, %p319
      %p321 = scmp.ne.s32.totalorder %s313, %s316
      %p322 = scmp.eq.s32.totalorder %s34, 0
      %p323 = por %p321, %p322
      %p324 = scmp.ne.s32.totalorder %s313, %s316
      %p325 = scmp.eq.s32.totalorder %s39, 1
      %p326 = por %p324, %p325
      %p327 = scmp.ne.s32.totalorder %s316, %s317
      %p328 = scmp.eq.s32.totalorder %s39, 0
      %p329 = por %p327, %p328
      %p330 = scmp.ne.s32.totalorder %s316, %s317
      %p331 = scmp.eq.s32.totalorder %s40, 1
      %p332 = por %p330, %p331
      %p334 = scmp.ne.s32.totalorder %s317, %s333
      %p335 = scmp.eq.s32.totalorder %s40, 0
      %p336 = por %p334, %p335
      %s337 = ssub.s32 %s41, %s60
      %s338 = ssub.s32 %s43, %s52
      %s339 = sor.u32 %s337, %s338
      %s340 = ssub.s32 %s42, %s56
      %s341 = sor.u32 %s339, %s340
      %p342 = scmp.eq.s32.totalorder %s341, 0
      %s344 = sadd.s32 %s343, 1
      %s345 = scalar_select %p342, %s343, %s344
      %p348 = pneg %p342
      %p349 = scmp.eq.s32.totalorder %s34, 1
      %p350 = por %p348, %p349
      %p351 = scmp.ne.s32.totalorder %s343, %s346
      %p352 = scmp.eq.s32.totalorder %s34, 0
      %p353 = por %p351, %p352
      %p354 = scmp.ne.s32.totalorder %s343, %s346
      %p355 = scmp.eq.s32.totalorder %s39, 1
      %p356 = por %p354, %p355
      %p357 = scmp.ne.s32.totalorder %s346, %s347
      %p358 = scmp.eq.s32.totalorder %s39, 0
      %p359 = por %p357, %p358
      %p360 = scmp.ne.s32.totalorder %s346, %s347
      %p361 = scmp.eq.s32.totalorder %s40, 1
      %p362 = por %p360, %p361
      %p364 = scmp.ne.s32.totalorder %s347, %s363
      %p365 = scmp.eq.s32.totalorder %s40, 0
      %p366 = por %p364, %p365
      %p367 = scmp.le.s32.totalorder 1, %s34
      %p368 = scmp.lt.s32.totalorder %s34, 3
      %p369 = pnand %p367, %p368
      %p370 = pneg %p369
      // Predicated region
      $region9: #{tpu_custom_call.1} parent=5 // pred_check
        _
      $region10: #{tpu_custom_call.1} parent=5 // pred_check_branch
        %372 = sbr.rel (%p369) target = $region12
      $region11: #{tpu_custom_call.1} parent=5 // pred_region
        %s373 = ssub.s32 %s34, 1
        // Predicated region
        $region13: #{tpu_custom_call.1} parent=11 // pred_check
          %p374 = pneg %p154
        $region14: #{tpu_custom_call.1} parent=11 // pred_check_branch
          %376 = sbr.rel (%p374) target = $region16
        $region15: #{tpu_custom_call.1} parent=11 // pred_region
          %s378 = ssub.s32 256, 256
          %379 = vsyncadd [#allocation9], %s378
          %s380 = sshll.u32 [#allocation8], 4
          %s381 = int_to_ptr.vmem [resolvable:$true] %s380
          %386 = dma.hbm_to_vmem [thread:$0]  %s3, 256, %s381, [#allocation9], 64, 64, 4
        $region16: #{tpu_custom_call.1} parent=11 // pred_fallthru
          _
        // Predicated region
        $region17: #{tpu_custom_call.1} parent=11 // pred_check
          %p387 = pneg %p175
        $region18: #{tpu_custom_call.1} parent=11 // pred_check_branch
          %389 = sbr.rel (%p387) target = $region20
        $region19: #{tpu_custom_call.1} parent=11 // pred_region
          %s391 = ssub.s32 16, 16
          %392 = vsyncadd [#allocation9], %s391
          %s394 = sshll.u32 [#allocation10], 4
          %s395 = int_to_ptr.vmem [resolvable:$true] %s394
          %397 = dma.hbm_to_vmem [thread:$0]  %s4, 16, %s395, [#allocation9]
        $region20: #{tpu_custom_call.1} parent=11 // pred_fallthru
          _
        // Predicated region
        $region21: #{tpu_custom_call.1} parent=11 // pred_check
          %p398 = pneg %p196
        $region22: #{tpu_custom_call.1} parent=11 // pred_check_branch
          %400 = sbr.rel (%p398) target = $region24
        $region23: #{tpu_custom_call.1} parent=11 // pred_region
          %s402 = ssub.s32 256, 256
          %403 = vsyncadd [#allocation12], %s402
          %s404 = sshll.u32 [#allocation11], 4
          %s405 = int_to_ptr.vmem [resolvable:$true] %s404
          %410 = dma.hbm_to_vmem [thread:$0]  %s5, 256, %s405, [#allocation12], 64, 64, 4
        $region24: #{tpu_custom_call.1} parent=11 // pred_fallthru
          _
        // Predicated region
        $region25: #{tpu_custom_call.1} parent=11 // pred_check
          %p411 = pneg %p217
        $region26: #{tpu_custom_call.1} parent=11 // pred_check_branch
          %413 = sbr.rel (%p411) target = $region28
        $region27: #{tpu_custom_call.1} parent=11 // pred_region
          %s415 = ssub.s32 16, 16
          %416 = vsyncadd [#allocation12], %s415
          %s418 = sshll.u32 [#allocation13], 4
          %s419 = int_to_ptr.vmem [resolvable:$true] %s418
          %421 = dma.hbm_to_vmem [thread:$0]  %s6, 16, %s419, [#allocation12]
        $region28: #{tpu_custom_call.1} parent=11 // pred_fallthru
          _
        // Predicated region
        $region29: #{tpu_custom_call.1} parent=11 // pred_check
          %p422 = pneg %p238
        $region30: #{tpu_custom_call.1} parent=11 // pred_check_branch
          %424 = sbr.rel (%p422) target = $region32
        $region31: #{tpu_custom_call.1} parent=11 // pred_region
          %s426 = ssub.s32 256, 256
          %427 = vsyncadd [#allocation15], %s426
          %s428 = sshll.u32 [#allocation14], 4
          %s429 = int_to_ptr.vmem [resolvable:$true] %s428
          %434 = dma.hbm_to_vmem [thread:$0]  %s7, 256, %s429, [#allocation15], 64, 64, 4
        $region32: #{tpu_custom_call.1} parent=11 // pred_fallthru
          _
        // Predicated region
        $region33: #{tpu_custom_call.1} parent=11 // pred_check
          %p435 = pneg %p259
        $region34: #{tpu_custom_call.1} parent=11 // pred_check_branch
          %437 = sbr.rel (%p435) target = $region36
        $region35: #{tpu_custom_call.1} parent=11 // pred_region
          %s439 = ssub.s32 16, 16
          %440 = vsyncadd [#allocation15], %s439
          %s442 = sshll.u32 [#allocation16], 4
          %s443 = int_to_ptr.vmem [resolvable:$true] %s442
          %445 = dma.hbm_to_vmem [thread:$0]  %s8, 16, %s443, [#allocation15]
        $region36: #{tpu_custom_call.1} parent=11 // pred_fallthru
          _
        // Predicated region
        $region37: #{tpu_custom_call.1} parent=11 // pred_check
          %p446 = pneg %p280
        $region38: #{tpu_custom_call.1} parent=11 // pred_check_branch
          %448 = sbr.rel (%p446) target = $region40
        $region39: #{tpu_custom_call.1} parent=11 // pred_region
          _
        $region40: #{tpu_custom_call.1} parent=11 // pred_fallthru
          _
        // Predicated region
        $region41: #{tpu_custom_call.1} parent=11 // pred_check
          %p449 = pneg %p301
        $region42: #{tpu_custom_call.1} parent=11 // pred_check_branch
          %451 = sbr.rel (%p449) target = $region44
        $region43: #{tpu_custom_call.1} parent=11 // pred_region
          _
        $region44: #{tpu_custom_call.1} parent=11 // pred_fallthru
          _
      $region12: #{tpu_custom_call.1} parent=5 // pred_fallthru
        _
      %p452 = scmp.lt.s32.totalorder %s34, 2
      // Predicated region
      $region45: #{tpu_custom_call.1} parent=5 // pred_check
        %p453 = pneg %p452
      $region46: #{tpu_custom_call.1} parent=5 // pred_check_branch
        %455 = sbr.rel (%p453) target = $region48
      $region47: #{tpu_custom_call.1} parent=5 // pred_region
        // Predicated region
        $region49: #{tpu_custom_call.1} parent=47 // pred_check
          %p456 = pneg %p75
        $region50: #{tpu_custom_call.1} parent=47 // pred_check_branch
          %458 = sbr.rel (%p456) target = $region52
        $region51: #{tpu_custom_call.1} parent=47 // pred_region
          %s459 = sand.u32 %s65, 1
          %s460 = scalar_lea.sflag [#allocation3], %s459
          %s461 = sand.u32 %s65, 1
          %s462 = smul.addr %s461, 4
          %s463 = scalar_lea.vmem [#allocation2], %s462
          %s465 = ssub.s32 64, 64
          %466 = vsyncadd %s460, %s465
          %s467 = sadd.s32 %s42, %s41
          %s468 = smul.addr %s467, 64
          %s469 = scalar_lea.hbm %s0, %s468
          %s471 = sshll.u32 %s463, 4
          %s472 = int_to_ptr.vmem [resolvable:$true] %s471
          %474 = dma.hbm_to_vmem [thread:$0]  %s469, 64, %s472, %s460
        $region52: #{tpu_custom_call.1} parent=47 // pred_fallthru
          _
        // Predicated region
        $region53: #{tpu_custom_call.1} parent=47 // pred_check
          %p475 = pneg %p101
        $region54: #{tpu_custom_call.1} parent=47 // pred_check_branch
          %477 = sbr.rel (%p475) target = $region56
        $region55: #{tpu_custom_call.1} parent=47 // pred_region
          %s478 = sand.u32 %s34, 1
          %s479 = scalar_lea.sflag [#allocation6], %s478
          %s480 = sand.u32 %s91, 1
          %s481 = smul.addr %s480, 4
          %s482 = scalar_lea.vmem [#allocation5], %s481
          %s484 = ssub.s32 64, 64
          %485 = vsyncadd %s479, %s484
          %s486 = smul.addr %s41, 64
          %s487 = scalar_lea.hbm %s1, %s486
          %s489 = sshll.u32 %s482, 4
          %s490 = int_to_ptr.vmem [resolvable:$true] %s489
          %492 = dma.hbm_to_vmem [thread:$0]  %s487, 64, %s490, %s479
        $region56: #{tpu_custom_call.1} parent=47 // pred_fallthru
          _
        // Predicated region
        $region57: #{tpu_custom_call.1} parent=47 // pred_check
          %p493 = pneg %p127
        $region58: #{tpu_custom_call.1} parent=47 // pred_check_branch
          %495 = sbr.rel (%p493) target = $region60
        $region59: #{tpu_custom_call.1} parent=47 // pred_region
          %s496 = sand.u32 %s34, 1
          %s497 = scalar_lea.sflag [#allocation6], %s496
          %s498 = sand.u32 %s117, 1
          %s499 = smul.addr %s498, 4
          %s500 = scalar_lea.vmem [#allocation7], %s499
          %s502 = ssub.s32 64, 64
          %503 = vsyncadd %s497, %s502
          %s504 = smul.addr %s41, 64
          %s505 = scalar_lea.hbm %s2, %s504
          %s507 = sshll.u32 %s500, 4
          %s508 = int_to_ptr.vmem [resolvable:$true] %s507
          %510 = dma.hbm_to_vmem [thread:$0]  %s505, 64, %s508, %s497
        $region60: #{tpu_custom_call.1} parent=47 // pred_fallthru
          _
      $region48: #{tpu_custom_call.1} parent=5 // pred_fallthru
        _
      %p511 = scmp.le.s32.totalorder 1, %s34
      %p512 = scmp.lt.s32.totalorder %s34, 3
      %p513 = pnand %p511, %p512
      %p514 = pneg %p513
      // Predicated region
      $region61: #{tpu_custom_call.1} parent=5 // pred_check
        _
      $region62: #{tpu_custom_call.1} parent=5 // pred_check_branch
        %516 = sbr.rel (%p513) target = $region64
      $region63: #{tpu_custom_call.1} parent=5 // pred_region
        %s517 = ssub.s32 %s34, 1
        %s518 = sand.u32 %s68, 1
        %s519 = scalar_lea.sflag [#allocation3], %s518
        %s520 = sand.u32 %s68, 1
        %s521 = smul.addr %s520, 4
        %s522 = scalar_lea.vmem [#allocation2], %s521
        // Predicated region
        $region65: #{tpu_custom_call.1} parent=63 // pred_check
          %p523 = pneg %p81
        $region66: #{tpu_custom_call.1} parent=63 // pred_check_branch
          %525 = sbr.rel (%p523) target = $region68
        $region67: #{tpu_custom_call.1} parent=63 // pred_region
          %526 = dma.done %s519, 64
        $region68: #{tpu_custom_call.1} parent=63 // pred_fallthru
          _
        %s527 = sand.u32 %s39, 1
        %s528 = scalar_lea.sflag [#allocation6], %s527
        %s529 = sand.u32 %s94, 1
        %s530 = smul.addr %s529, 4
        %s531 = scalar_lea.vmem [#allocation5], %s530
        // Predicated region
        $region69: #{tpu_custom_call.1} parent=63 // pred_check
          %p532 = pneg %p107
        $region70: #{tpu_custom_call.1} parent=63 // pred_check_branch
          %534 = sbr.rel (%p532) target = $region72
        $region71: #{tpu_custom_call.1} parent=63 // pred_region
          %535 = dma.done %s528, 64
        $region72: #{tpu_custom_call.1} parent=63 // pred_fallthru
          _
        %s536 = sand.u32 %s39, 1
        %s537 = scalar_lea.sflag [#allocation6], %s536
        %s538 = sand.u32 %s120, 1
        %s539 = smul.addr %s538, 4
        %s540 = scalar_lea.vmem [#allocation7], %s539
        // Predicated region
        $region73: #{tpu_custom_call.1} parent=63 // pred_check
          %p541 = pneg %p133
        $region74: #{tpu_custom_call.1} parent=63 // pred_check_branch
          %543 = sbr.rel (%p541) target = $region76
        $region75: #{tpu_custom_call.1} parent=63 // pred_region
          %544 = dma.done %s537, 64
        $region76: #{tpu_custom_call.1} parent=63 // pred_fallthru
          _
        // Predicated region
        $region77: #{tpu_custom_call.1} parent=63 // pred_check
          %p545 = pneg %p154
        $region78: #{tpu_custom_call.1} parent=63 // pred_check_branch
          %547 = sbr.rel (%p545) target = $region80
        $region79: #{tpu_custom_call.1} parent=63 // pred_region
          %548 = dma.done [#allocation9], 256
        $region80: #{tpu_custom_call.1} parent=63 // pred_fallthru
          _
        // Predicated region
        $region81: #{tpu_custom_call.1} parent=63 // pred_check
          %p549 = pneg %p175
        $region82: #{tpu_custom_call.1} parent=63 // pred_check_branch
          %551 = sbr.rel (%p549) target = $region84
        $region83: #{tpu_custom_call.1} parent=63 // pred_region
          %552 = dma.done [#allocation9], 16
        $region84: #{tpu_custom_call.1} parent=63 // pred_fallthru
          _
        // Predicated region
        $region85: #{tpu_custom_call.1} parent=63 // pred_check
          %p553 = pneg %p196
        $region86: #{tpu_custom_call.1} parent=63 // pred_check_branch
          %555 = sbr.rel (%p553) target = $region88
        $region87: #{tpu_custom_call.1} parent=63 // pred_region
          %556 = dma.done [#allocation12], 256
        $region88: #{tpu_custom_call.1} parent=63 // pred_fallthru
          _
        // Predicated region
        $region89: #{tpu_custom_call.1} parent=63 // pred_check
          %p557 = pneg %p217
        $region90: #{tpu_custom_call.1} parent=63 // pred_check_branch
          %559 = sbr.rel (%p557) target = $region92
        $region91: #{tpu_custom_call.1} parent=63 // pred_region
          %560 = dma.done [#allocation12], 16
        $region92: #{tpu_custom_call.1} parent=63 // pred_fallthru
          _
        // Predicated region
        $region93: #{tpu_custom_call.1} parent=63 // pred_check
          %p561 = pneg %p238
        $region94: #{tpu_custom_call.1} parent=63 // pred_check_branch
          %563 = sbr.rel (%p561) target = $region96
        $region95: #{tpu_custom_call.1} parent=63 // pred_region
          %564 = dma.done [#allocation15], 256
        $region96: #{tpu_custom_call.1} parent=63 // pred_fallthru
          _
        // Predicated region
        $region97: #{tpu_custom_call.1} parent=63 // pred_check
          %p565 = pneg %p259
        $region98: #{tpu_custom_call.1} parent=63 // pred_check_branch
          %567 = sbr.rel (%p565) target = $region100
        $region99: #{tpu_custom_call.1} parent=63 // pred_region
          %568 = dma.done [#allocation15], 16
        $region100: #{tpu_custom_call.1} parent=63 // pred_fallthru
          _
        %s569 = sand.u32 %s68, 1
        %s570 = scalar_lea.sflag [#allocation3], %s569
        %s571 = sand.u32 %s68, 1
        %s572 = smul.addr %s571, 4
        %s573 = scalar_lea.vmem [#allocation2], %s572
        %p574 = pneg %p81
        %p575 = pneg %p78
        %s576 = sand.u32 %s39, 1
        %s577 = scalar_lea.sflag [#allocation6], %s576
        %s578 = sand.u32 %s94, 1
        %s579 = smul.addr %s578, 4
        %s580 = scalar_lea.vmem [#allocation5], %s579
        %p581 = pneg %p107
        %p582 = pneg %p104
        %s583 = sand.u32 %s39, 1
        %s584 = scalar_lea.sflag [#allocation6], %s583
        %s585 = sand.u32 %s120, 1
        %s586 = smul.addr %s585, 4
        %s587 = scalar_lea.vmem [#allocation7], %s586
        %p588 = pneg %p133
        %p589 = pneg %p130
        %p590 = pneg %p154
        %p591 = pneg %p151
        %p592 = pneg %p175
        %p593 = pneg %p172
        %p594 = pneg %p196
        %p595 = pneg %p193
        %p596 = pneg %p217
        %p597 = pneg %p214
        %p598 = pneg %p238
        %p599 = pneg %p235
        %p600 = pneg %p259
        %p601 = pneg %p256
        %p602 = pneg %p280
        %p603 = pneg %p277
        %p604 = pneg %p301
        %p605 = pneg %p298
        %p606 = pneg %p329
        %p607 = pneg %p326
        %s608 = sand.u32 %s316, 1
        %s609 = scalar_lea.sflag [#allocation4], %s608
        %s610 = sand.u32 %s316, 1
        %s611 = smul.addr %s610, 8
        %s612 = scalar_lea.vmem [#allocation17], %s611
        %p613 = pneg %p359
        %p614 = pneg %p356
        %s615 = sand.u32 %s346, 1
        %s616 = scalar_lea.sflag [#allocation19], %s615
        %s617 = sand.u32 %s346, 1
        %s618 = smul.addr %s617, 32
        %s619 = scalar_lea.vmem [#allocation18], %s618
        %s620 = smul.u32 4, %s46
        %v622 = vld [vmem:[%s522] sm:$0xf]
        %v623 = vld [vmem:[%s531] sm:$0xf]
        %v624 = vld [vmem:[%s540] sm:$0xf]
        %s625 = smul.u32 %s46, 4
        %s626 = smul.addr %s625, 4
        %s627 = scalar_lea.vmem [#allocation8], %s626
        %v628 = vld [vmem:[%s627] sm:$0xf]
        %v629 = vld [vmem:[%s627 + $0x4] sm:$0xf]
        %v630 = vld [vmem:[%s627 + $0x8] sm:$0xf]
        %v631 = vld [vmem:[%s627 + $0xc] sm:$0xf]
        %s632 = scalar_lea.vmem [#allocation10], %s46
        %v633 = vld [vmem:[%s632] sm:$0x1]
        %v635 = vlaneseq
        %v636 = vshrl.u32 %v635, 7
        %v637 = vsub.s32 0, %v636
        %v638 = vrot.slane %v633, %v637
        %v644 = vunpack.c.l.b16 %v628
        %v645 = vunpack.c.l.b16 %v629
        %v646 = vunpack.c.l.b16 %v630
        %v647 = vunpack.c.l.b16 %v631
        %v648 = vpack.c.b16 %v645, %v644
        %v649 = vpack.c.b16 %v647, %v646
        %vm652 = vcmask 261120
        %v654 = vsel %vm652, %v622, 0
        %656 = vmatprep.subr.bf16.mxu0 0
        %657 = vmatpush1.bf16.msra.mxu0 0
        %658 = vmatprep.subr.bf16.mxu0 0
        %659 = vmatpush1.bf16.msra.mxu0 0
        %660 = vmatprep.subr.bf16.mxu0 0
        %661 = vmatpush1.bf16.msra.mxu0 0
        %662 = vmatprep.subr.bf16.mxu0 0
        %663 = vmatpush1.bf16.msra.mxu0 0
        %664 = vmatprep.subr.bf16.mxu0 0
        %665 = vmatpush1.bf16.msra.mxu0 0
        %666 = vmatprep.subr.bf16.mxu0 0
        %667 = vmatpush1.bf16.msra.mxu0 0
        %668 = vmatprep.subr.bf16.mxu0 0
        %669 = vmatpush1.bf16.msra.mxu0 %v649
        %670 = vmatprep.subr.bf16.mxu0 0
        %671 = vmatpush1.bf16.msra.mxu0 %v648
        %672 = vmatprep.subr.bf16.mxu0 0
        %673 = vmatpush2.bf16.msra.mxu0 0
        %674 = vmatprep.subr.bf16.mxu0 0
        %675 = vmatpush2.bf16.msra.mxu0 0
        %676 = vmatprep.subr.bf16.mxu0 0
        %677 = vmatpush2.bf16.msra.mxu0 0
        %678 = vmatprep.subr.bf16.mxu0 0
        %679 = vmatpush2.bf16.msra.mxu0 0
        %680 = vmatprep.subr.bf16.mxu0 0
        %681 = vmatpush2.bf16.msra.mxu0 0
        %682 = vmatprep.subr.bf16.mxu0 0
        %683 = vmatpush2.bf16.msra.mxu0 0
        %684 = vmatprep.subr.bf16.mxu0 0
        %685 = vmatpush2.bf16.msra.mxu0 0
        %686 = vmatprep.subr.bf16.mxu0 0
        %687 = vmatpush2.bf16.msra.mxu0 0
        %688 = vmatprep.mubr.bf16.mxu0 0
        %689 = vmatmul.mubr.bf16.gmra.mxu0 %v654
        %v690 = vpop.f32.mrf.mxu0
        %v691 = vadd.f32 %v638, %v690
        %v692 = vpop.f32.mrf.mxu0
        %v693 = vpop.f32.mrf.mxu0
        %v694 = vpop.f32.mrf.mxu0
        %695 = vdwg.mxu0
        %s696 = smul.addr %s625, 4
        %s697 = scalar_lea.vmem [#allocation11], %s696
        %v698 = vld [vmem:[%s697] sm:$0xf]
        %v699 = vld [vmem:[%s697 + $0x4] sm:$0xf]
        %v700 = vld [vmem:[%s697 + $0x8] sm:$0xf]
        %v701 = vld [vmem:[%s697 + $0xc] sm:$0xf]
        %s702 = scalar_lea.vmem [#allocation13], %s46
        %v703 = vld [vmem:[%s702] sm:$0x1]
        %v705 = vlaneseq
        %v706 = vshrl.u32 %v705, 7
        %v707 = vsub.s32 0, %v706
        %v708 = vrot.slane %v703, %v707
        %v714 = vunpack.c.l.b16 %v698
        %v715 = vunpack.c.l.b16 %v699
        %v716 = vunpack.c.l.b16 %v700
        %v717 = vunpack.c.l.b16 %v701
        %v718 = vpack.c.b16 %v715, %v714
        %v719 = vpack.c.b16 %v717, %v716
        %v723 = vsel %vm652, %v623, 0
        %725 = vmatprep.subr.bf16.mxu0 0
        %726 = vmatpush1.bf16.msra.mxu0 0
        %727 = vmatprep.subr.bf16.mxu0 0
        %728 = vmatpush1.bf16.msra.mxu0 0
        %729 = vmatprep.subr.bf16.mxu0 0
        %730 = vmatpush1.bf16.msra.mxu0 0
        %731 = vmatprep.subr.bf16.mxu0 0
        %732 = vmatpush1.bf16.msra.mxu0 0
        %733 = vmatprep.subr.bf16.mxu0 0
        %734 = vmatpush1.bf16.msra.mxu0 0
        %735 = vmatprep.subr.bf16.mxu0 0
        %736 = vmatpush1.bf16.msra.mxu0 0
        %737 = vmatprep.subr.bf16.mxu0 0
        %738 = vmatpush1.bf16.msra.mxu0 %v719
        %739 = vmatprep.subr.bf16.mxu0 0
        %740 = vmatpush1.bf16.msra.mxu0 %v718
        %741 = vmatprep.subr.bf16.mxu0 0
        %742 = vmatpush2.bf16.msra.mxu0 0
        %743 = vmatprep.subr.bf16.mxu0 0
        %744 = vmatpush2.bf16.msra.mxu0 0
        %745 = vmatprep.subr.bf16.mxu0 0
        %746 = vmatpush2.bf16.msra.mxu0 0
        %747 = vmatprep.subr.bf16.mxu0 0
        %748 = vmatpush2.bf16.msra.mxu0 0
        %749 = vmatprep.subr.bf16.mxu0 0
        %750 = vmatpush2.bf16.msra.mxu0 0
        %751 = vmatprep.subr.bf16.mxu0 0
        %752 = vmatpush2.bf16.msra.mxu0 0
        %753 = vmatprep.subr.bf16.mxu0 0
        %754 = vmatpush2.bf16.msra.mxu0 0
        %755 = vmatprep.subr.bf16.mxu0 0
        %756 = vmatpush2.bf16.msra.mxu0 0
        %757 = vmatprep.mubr.bf16.mxu0 0
        %758 = vmatmul.mubr.bf16.gmra.mxu0 %v723
        %v759 = vpop.f32.mrf.mxu0
        %v760 = vadd.f32 %v708, %v759
        %v761 = vpop.f32.mrf.mxu0
        %v762 = vpop.f32.mrf.mxu0
        %v763 = vpop.f32.mrf.mxu0
        %764 = vdwg.mxu0
        %s765 = smul.addr %s625, 4
        %s766 = scalar_lea.vmem [#allocation14], %s765
        %v767 = vld [vmem:[%s766] sm:$0xf]
        %v768 = vld [vmem:[%s766 + $0x4] sm:$0xf]
        %v769 = vld [vmem:[%s766 + $0x8] sm:$0xf]
        %v770 = vld [vmem:[%s766 + $0xc] sm:$0xf]
        %s771 = scalar_lea.vmem [#allocation16], %s46
        %v772 = vld [vmem:[%s771] sm:$0x1]
        %v774 = vlaneseq
        %v775 = vshrl.u32 %v774, 7
        %v776 = vsub.s32 0, %v775
        %v777 = vrot.slane %v772, %v776
        %v783 = vunpack.c.l.b16 %v767
        %v784 = vunpack.c.l.b16 %v768
        %v785 = vunpack.c.l.b16 %v769
        %v786 = vunpack.c.l.b16 %v770
        %v787 = vpack.c.b16 %v784, %v783
        %v788 = vpack.c.b16 %v786, %v785
        %v792 = vsel %vm652, %v624, 0
        %794 = vmatprep.subr.bf16.mxu0 0
        %795 = vmatpush1.bf16.msra.mxu0 0
        %796 = vmatprep.subr.bf16.mxu0 0
        %797 = vmatpush1.bf16.msra.mxu0 0
        %798 = vmatprep.subr.bf16.mxu0 0
        %799 = vmatpush1.bf16.msra.mxu0 0
        %800 = vmatprep.subr.bf16.mxu0 0
        %801 = vmatpush1.bf16.msra.mxu0 0
        %802 = vmatprep.subr.bf16.mxu0 0
        %803 = vmatpush1.bf16.msra.mxu0 0
        %804 = vmatprep.subr.bf16.mxu0 0
        %805 = vmatpush1.bf16.msra.mxu0 0
        %806 = vmatprep.subr.bf16.mxu0 0
        %807 = vmatpush1.bf16.msra.mxu0 %v788
        %808 = vmatprep.subr.bf16.mxu0 0
        %809 = vmatpush1.bf16.msra.mxu0 %v787
        %810 = vmatprep.subr.bf16.mxu0 0
        %811 = vmatpush2.bf16.msra.mxu0 0
        %812 = vmatprep.subr.bf16.mxu0 0
        %813 = vmatpush2.bf16.msra.mxu0 0
        %814 = vmatprep.subr.bf16.mxu0 0
        %815 = vmatpush2.bf16.msra.mxu0 0
        %816 = vmatprep.subr.bf16.mxu0 0
        %817 = vmatpush2.bf16.msra.mxu0 0
        %818 = vmatprep.subr.bf16.mxu0 0
        %819 = vmatpush2.bf16.msra.mxu0 0
        %820 = vmatprep.subr.bf16.mxu0 0
        %821 = vmatpush2.bf16.msra.mxu0 0
        %822 = vmatprep.subr.bf16.mxu0 0
        %823 = vmatpush2.bf16.msra.mxu0 0
        %824 = vmatprep.subr.bf16.mxu0 0
        %825 = vmatpush2.bf16.msra.mxu0 0
        %826 = vmatprep.mubr.bf16.mxu0 0
        %827 = vmatmul.mubr.bf16.gmra.mxu0 %v792
        %v828 = vpop.f32.mrf.mxu0
        %v829 = vadd.f32 %v777, %v828
        %v830 = vpop.f32.mrf.mxu0
        %v831 = vpop.f32.mrf.mxu0
        %v832 = vpop.f32.mrf.mxu0
        %833 = vdwg.mxu0
        %v834 = vpack.c.bf16 %v691, %v691
        %v835 = vpack.c.bf16 %v760, %v760
        %v836 = vpack.c.bf16 %v829, %v829
        %vm837 = vcmask 64512
        %v839 = vsel %vm837, %v834, 0
        %v842 = vsel %vm837, %v835, 0
        %844 = vmatprep.subr.bf16.mxu0 0
        %845 = vmatpush1.bf16.xpose.msra.mxu0 0
        %846 = vmatprep.subr.bf16.mxu0 0
        %847 = vmatpush1.bf16.xpose.msra.mxu0 0
        %848 = vmatprep.subr.bf16.mxu0 0
        %849 = vmatpush1.bf16.xpose.msra.mxu0 0
        %850 = vmatprep.subr.bf16.mxu0 0
        %851 = vmatpush1.bf16.xpose.msra.mxu0 0
        %852 = vmatprep.subr.bf16.mxu0 0
        %853 = vmatpush1.bf16.xpose.msra.mxu0 0
        %854 = vmatprep.subr.bf16.mxu0 0
        %855 = vmatpush1.bf16.xpose.msra.mxu0 0
        %856 = vmatprep.subr.bf16.mxu0 0
        %857 = vmatpush1.bf16.xpose.msra.mxu0 0
        %858 = vmatprep.subr.bf16.mxu0 0
        %859 = vmatpush1.bf16.xpose.msra.mxu0 %v842
        %860 = vmatprep.subr.bf16.mxu0 0
        %861 = vmatpush2.bf16.xpose.msra.mxu0 0
        %862 = vmatprep.subr.bf16.mxu0 0
        %863 = vmatpush2.bf16.xpose.msra.mxu0 0
        %864 = vmatprep.subr.bf16.mxu0 0
        %865 = vmatpush2.bf16.xpose.msra.mxu0 0
        %866 = vmatprep.subr.bf16.mxu0 0
        %867 = vmatpush2.bf16.xpose.msra.mxu0 0
        %868 = vmatprep.subr.bf16.mxu0 0
        %869 = vmatpush2.bf16.xpose.msra.mxu0 0
        %870 = vmatprep.subr.bf16.mxu0 0
        %871 = vmatpush2.bf16.xpose.msra.mxu0 0
        %872 = vmatprep.subr.bf16.mxu0 0
        %873 = vmatpush2.bf16.xpose.msra.mxu0 0
        %874 = vmatprep.subr.bf16.mxu0 0
        %875 = vmatpush2.bf16.xpose.msra.mxu0 0
        %876 = vmatprep.mubr.bf16.mxu0 0
        %877 = vmatmul.mubr.bf16.gmra.mxu0 %v839
        %v878 = vpop.f32.mrf.mxu0
        %v879 = vadd.f32 0.0, %v878
        %v880 = vpop.f32.mrf.mxu0
        %v881 = vpop.f32.mrf.mxu0
        %v882 = vpop.f32.mrf.mxu0
        %883 = vdwg.mxu0
        %v884 = vsel %vm837, %v879, -inf
        %885 = vmax.xlane.f32.xlu0 %v884
        %v886 = vpop.xlane.xlu0 %885
        %v887 = vsub.f32 %v879, %v886
        %v888 = vmul.f32 %v887, 1.442695
        %v889 = vpow.pop %v888
        %v890 = vsel %vm837, %v889, 0.0
        %891 = vadd.xlane.f32.xlu0 %v890
        %v892 = vpop.xlane.xlu0 %891
        %v893 = vrcp.pop %v892
        %v894 = vmul.f32 %v889, %v893
        %895 = vst.msk [vmem:[%s619] sm:$0xff] %vm837, %v894
        %v896 = vpack.c.bf16 %v889, %v889
        %v898 = vsel %vm837, %v896, 0
        %vm900 = vcmask 1043456
        %v902 = vsel %vm900, %v836, 0
        %904 = vmatprep.subr.bf16.mxu0 0
        %905 = vmatpush1.bf16.msra.mxu0 0
        %906 = vmatprep.subr.bf16.mxu0 0
        %907 = vmatpush1.bf16.msra.mxu0 0
        %908 = vmatprep.subr.bf16.mxu0 0
        %909 = vmatpush1.bf16.msra.mxu0 0
        %910 = vmatprep.subr.bf16.mxu0 0
        %911 = vmatpush1.bf16.msra.mxu0 0
        %912 = vmatprep.subr.bf16.mxu0 0
        %913 = vmatpush1.bf16.msra.mxu0 0
        %914 = vmatprep.subr.bf16.mxu0 0
        %915 = vmatpush1.bf16.msra.mxu0 0
        %916 = vmatprep.subr.bf16.mxu0 0
        %917 = vmatpush1.bf16.msra.mxu0 0
        %918 = vmatprep.subr.bf16.mxu0 0
        %919 = vmatpush1.bf16.msra.mxu0 %v902
        %920 = vmatprep.subr.bf16.mxu0 0
        %921 = vmatpush2.bf16.msra.mxu0 0
        %922 = vmatprep.subr.bf16.mxu0 0
        %923 = vmatpush2.bf16.msra.mxu0 0
        %924 = vmatprep.subr.bf16.mxu0 0
        %925 = vmatpush2.bf16.msra.mxu0 0
        %926 = vmatprep.subr.bf16.mxu0 0
        %927 = vmatpush2.bf16.msra.mxu0 0
        %928 = vmatprep.subr.bf16.mxu0 0
        %929 = vmatpush2.bf16.msra.mxu0 0
        %930 = vmatprep.subr.bf16.mxu0 0
        %931 = vmatpush2.bf16.msra.mxu0 0
        %932 = vmatprep.subr.bf16.mxu0 0
        %933 = vmatpush2.bf16.msra.mxu0 0
        %934 = vmatprep.subr.bf16.mxu0 0
        %935 = vmatpush2.bf16.msra.mxu0 0
        %936 = vmatprep.mubr.bf16.mxu0 0
        %937 = vmatmul.mubr.bf16.gmra.mxu0 %v898
        %v938 = vpop.f32.mrf.mxu0
        %v939 = vadd.f32 0.0, %v938
        %v940 = vpop.f32.mrf.mxu0
        %v941 = vpop.f32.mrf.mxu0
        %v942 = vpop.f32.mrf.mxu0
        %943 = vdwg.mxu0
        %v944 = vmul.f32 %v939, %v893
        %v945 = vpack.c.bf16 %v944, %v944
        %947 = vrot.lane.b32.xlu0 %v834, 120
        %v948 = vpop.permute.xlu0 %947
        %950 = vrot.lane.b32.xlu0 %v835, 120
        %v951 = vpop.permute.xlu0 %950
        %v953 = vsel %vm837, %v948, 0
        %v956 = vsel %vm837, %v951, 0
        %958 = vmatprep.subr.bf16.mxu0 0
        %959 = vmatpush1.bf16.xpose.msra.mxu0 0
        %960 = vmatprep.subr.bf16.mxu0 0
        %961 = vmatpush1.bf16.xpose.msra.mxu0 0
        %962 = vmatprep.subr.bf16.mxu0 0
        %963 = vmatpush1.bf16.xpose.msra.mxu0 0
        %964 = vmatprep.subr.bf16.mxu0 0
        %965 = vmatpush1.bf16.xpose.msra.mxu0 0
        %966 = vmatprep.subr.bf16.mxu0 0
        %967 = vmatpush1.bf16.xpose.msra.mxu0 0
        %968 = vmatprep.subr.bf16.mxu0 0
        %969 = vmatpush1.bf16.xpose.msra.mxu0 0
        %970 = vmatprep.subr.bf16.mxu0 0
        %971 = vmatpush1.bf16.xpose.msra.mxu0 0
        %972 = vmatprep.subr.bf16.mxu0 0
        %973 = vmatpush1.bf16.xpose.msra.mxu0 %v956
        %974 = vmatprep.subr.bf16.mxu0 0
        %975 = vmatpush2.bf16.xpose.msra.mxu0 0
        %976 = vmatprep.subr.bf16.mxu0 0
        %977 = vmatpush2.bf16.xpose.msra.mxu0 0
        %978 = vmatprep.subr.bf16.mxu0 0
        %979 = vmatpush2.bf16.xpose.msra.mxu0 0
        %980 = vmatprep.subr.bf16.mxu0 0
        %981 = vmatpush2.bf16.xpose.msra.mxu0 0
        %982 = vmatprep.subr.bf16.mxu0 0
        %983 = vmatpush2.bf16.xpose.msra.mxu0 0
        %984 = vmatprep.subr.bf16.mxu0 0
        %985 = vmatpush2.bf16.xpose.msra.mxu0 0
        %986 = vmatprep.subr.bf16.mxu0 0
        %987 = vmatpush2.bf16.xpose.msra.mxu0 0
        %988 = vmatprep.subr.bf16.mxu0 0
        %989 = vmatpush2.bf16.xpose.msra.mxu0 0
        %990 = vmatprep.mubr.bf16.mxu0 0
        %991 = vmatmul.mubr.bf16.gmra.mxu0 %v953
        %v992 = vpop.f32.mrf.mxu0
        %v993 = vadd.f32 0.0, %v992
        %v994 = vpop.f32.mrf.mxu0
        %v995 = vpop.f32.mrf.mxu0
        %v996 = vpop.f32.mrf.mxu0
        %997 = vdwg.mxu0
        %v998 = vsel %vm837, %v993, -inf
        %999 = vmax.xlane.f32.xlu0 %v998
        %v1000 = vpop.xlane.xlu0 %999
        %v1001 = vsub.f32 %v993, %v1000
        %v1002 = vmul.f32 %v1001, 1.442695
        %v1003 = vpow.pop %v1002
        %v1004 = vsel %vm837, %v1003, 0.0
        %1005 = vadd.xlane.f32.xlu0 %v1004
        %v1006 = vpop.xlane.xlu0 %1005
        %v1007 = vrcp.pop %v1006
        %v1008 = vmul.f32 %v1003, %v1007
        %s1009 = scalar_lea.vmem %s619, 8 [#allocation18]
        %1010 = vst.msk [vmem:[%s1009] sm:$0xff] %vm837, %v1008
        %v1011 = vpack.c.bf16 %v1003, %v1003
        %1013 = vrot.lane.b32.xlu0 %v836, 120
        %v1014 = vpop.permute.xlu0 %1013
        %v1016 = vsel %vm837, %v1011, 0
        %v1019 = vsel %vm900, %v1014, 0
        %1021 = vmatprep.subr.bf16.mxu0 0
        %1022 = vmatpush1.bf16.msra.mxu0 0
        %1023 = vmatprep.subr.bf16.mxu0 0
        %1024 = vmatpush1.bf16.msra.mxu0 0
        %1025 = vmatprep.subr.bf16.mxu0 0
        %1026 = vmatpush1.bf16.msra.mxu0 0
        %1027 = vmatprep.subr.bf16.mxu0 0
        %1028 = vmatpush1.bf16.msra.mxu0 0
        %1029 = vmatprep.subr.bf16.mxu0 0
        %1030 = vmatpush1.bf16.msra.mxu0 0
        %1031 = vmatprep.subr.bf16.mxu0 0
        %1032 = vmatpush1.bf16.msra.mxu0 0
        %1033 = vmatprep.subr.bf16.mxu0 0
        %1034 = vmatpush1.bf16.msra.mxu0 0
        %1035 = vmatprep.subr.bf16.mxu0 0
        %1036 = vmatpush1.bf16.msra.mxu0 %v1019
        %1037 = vmatprep.subr.bf16.mxu0 0
        %1038 = vmatpush2.bf16.msra.mxu0 0
        %1039 = vmatprep.subr.bf16.mxu0 0
        %1040 = vmatpush2.bf16.msra.mxu0 0
        %1041 = vmatprep.subr.bf16.mxu0 0
        %1042 = vmatpush2.bf16.msra.mxu0 0
        %1043 = vmatprep.subr.bf16.mxu0 0
        %1044 = vmatpush2.bf16.msra.mxu0 0
        %1045 = vmatprep.subr.bf16.mxu0 0
        %1046 = vmatpush2.bf16.msra.mxu0 0
        %1047 = vmatprep.subr.bf16.mxu0 0
        %1048 = vmatpush2.bf16.msra.mxu0 0
        %1049 = vmatprep.subr.bf16.mxu0 0
        %1050 = vmatpush2.bf16.msra.mxu0 0
        %1051 = vmatprep.subr.bf16.mxu0 0
        %1052 = vmatpush2.bf16.msra.mxu0 0
        %1053 = vmatprep.mubr.bf16.mxu0 0
        %1054 = vmatmul.mubr.bf16.gmra.mxu0 %v1016
        %v1055 = vpop.f32.mrf.mxu0
        %v1056 = vadd.f32 0.0, %v1055
        %v1057 = vpop.f32.mrf.mxu0
        %v1058 = vpop.f32.mrf.mxu0
        %v1059 = vpop.f32.mrf.mxu0
        %1060 = vdwg.mxu0
        %v1061 = vmul.f32 %v1056, %v1007
        %v1062 = vpack.c.bf16 %v1061, %v1061
        %1063 = vrot.lane.b32.xlu0 %v834, 112
        %v1064 = vpop.permute.xlu0 %1063
        %1065 = vrot.lane.b32.xlu0 %v835, 112
        %v1066 = vpop.permute.xlu0 %1065
        %v1068 = vsel %vm837, %v1064, 0
        %v1071 = vsel %vm837, %v1066, 0
        %1073 = vmatprep.subr.bf16.mxu0 0
        %1074 = vmatpush1.bf16.xpose.msra.mxu0 0
        %1075 = vmatprep.subr.bf16.mxu0 0
        %1076 = vmatpush1.bf16.xpose.msra.mxu0 0
        %1077 = vmatprep.subr.bf16.mxu0 0
        %1078 = vmatpush1.bf16.xpose.msra.mxu0 0
        %1079 = vmatprep.subr.bf16.mxu0 0
        %1080 = vmatpush1.bf16.xpose.msra.mxu0 0
        %1081 = vmatprep.subr.bf16.mxu0 0
        %1082 = vmatpush1.bf16.xpose.msra.mxu0 0
        %1083 = vmatprep.subr.bf16.mxu0 0
        %1084 = vmatpush1.bf16.xpose.msra.mxu0 0
        %1085 = vmatprep.subr.bf16.mxu0 0
        %1086 = vmatpush1.bf16.xpose.msra.mxu0 0
        %1087 = vmatprep.subr.bf16.mxu0 0
        %1088 = vmatpush1.bf16.xpose.msra.mxu0 %v1071
        %1089 = vmatprep.subr.bf16.mxu0 0
        %1090 = vmatpush2.bf16.xpose.msra.mxu0 0
        %1091 = vmatprep.subr.bf16.mxu0 0
        %1092 = vmatpush2.bf16.xpose.msra.mxu0 0
        %1093 = vmatprep.subr.bf16.mxu0 0
        %1094 = vmatpush2.bf16.xpose.msra.mxu0 0
        %1095 = vmatprep.subr.bf16.mxu0 0
        %1096 = vmatpush2.bf16.xpose.msra.mxu0 0
        %1097 = vmatprep.subr.bf16.mxu0 0
        %1098 = vmatpush2.bf16.xpose.msra.mxu0 0
        %1099 = vmatprep.subr.bf16.mxu0 0
        %1100 = vmatpush2.bf16.xpose.msra.mxu0 0
        %1101 = vmatprep.subr.bf16.mxu0 0
        %1102 = vmatpush2.bf16.xpose.msra.mxu0 0
        %1103 = vmatprep.subr.bf16.mxu0 0
        %1104 = vmatpush2.bf16.xpose.msra.mxu0 0
        %1105 = vmatprep.mubr.bf16.mxu0 0
        %1106 = vmatmul.mubr.bf16.gmra.mxu0 %v1068
        %v1107 = vpop.f32.mrf.mxu0
        %v1108 = vadd.f32 0.0, %v1107
        %v1109 = vpop.f32.mrf.mxu0
        %v1110 = vpop.f32.mrf.mxu0
        %v1111 = vpop.f32.mrf.mxu0
        %1112 = vdwg.mxu0
        %v1113 = vsel %vm837, %v1108, -inf
        %1114 = vmax.xlane.f32.xlu0 %v1113
        %v1115 = vpop.xlane.xlu0 %1114
        %v1116 = vsub.f32 %v1108, %v1115
        %v1117 = vmul.f32 %v1116, 1.442695
        %v1118 = vpow.pop %v1117
        %v1119 = vsel %vm837, %v1118, 0.0
        %1120 = vadd.xlane.f32.xlu0 %v1119
        %v1121 = vpop.xlane.xlu0 %1120
        %v1122 = vrcp.pop %v1121
        %v1123 = vmul.f32 %v1118, %v1122
        %s1124 = scalar_lea.vmem %s619, 16 [#allocation18]
        %1125 = vst.msk [vmem:[%s1124] sm:$0xff] %vm837, %v1123
        %v1126 = vpack.c.bf16 %v1118, %v1118
        %1127 = vrot.lane.b32.xlu0 %v836, 112
        %v1128 = vpop.permute.xlu0 %1127
        %v1130 = vsel %vm837, %v1126, 0
        %v1133 = vsel %vm900, %v1128, 0
        %1135 = vmatprep.subr.bf16.mxu0 0
        %1136 = vmatpush1.bf16.msra.mxu0 0
        %1137 = vmatprep.subr.bf16.mxu0 0
        %1138 = vmatpush1.bf16.msra.mxu0 0
        %1139 = vmatprep.subr.bf16.mxu0 0
        %1140 = vmatpush1.bf16.msra.mxu0 0
        %1141 = vmatprep.subr.bf16.mxu0 0
        %1142 = vmatpush1.bf16.msra.mxu0 0
        %1143 = vmatprep.subr.bf16.mxu0 0
        %1144 = vmatpush1.bf16.msra.mxu0 0
        %1145 = vmatprep.subr.bf16.mxu0 0
        %1146 = vmatpush1.bf16.msra.mxu0 0
        %1147 = vmatprep.subr.bf16.mxu0 0
        %1148 = vmatpush1.bf16.msra.mxu0 0
        %1149 = vmatprep.subr.bf16.mxu0 0
        %1150 = vmatpush1.bf16.msra.mxu0 %v1133
        %1151 = vmatprep.subr.bf16.mxu0 0
        %1152 = vmatpush2.bf16.msra.mxu0 0
        %1153 = vmatprep.subr.bf16.mxu0 0
        %1154 = vmatpush2.bf16.msra.mxu0 0
        %1155 = vmatprep.subr.bf16.mxu0 0
        %1156 = vmatpush2.bf16.msra.mxu0 0
        %1157 = vmatprep.subr.bf16.mxu0 0
        %1158 = vmatpush2.bf16.msra.mxu0 0
        %1159 = vmatprep.subr.bf16.mxu0 0
        %1160 = vmatpush2.bf16.msra.mxu0 0
        %1161 = vmatprep.subr.bf16.mxu0 0
        %1162 = vmatpush2.bf16.msra.mxu0 0
        %1163 = vmatprep.subr.bf16.mxu0 0
        %1164 = vmatpush2.bf16.msra.mxu0 0
        %1165 = vmatprep.subr.bf16.mxu0 0
        %1166 = vmatpush2.bf16.msra.mxu0 0
        %1167 = vmatprep.mubr.bf16.mxu0 0
        %1168 = vmatmul.mubr.bf16.gmra.mxu0 %v1130
        %v1169 = vpop.f32.mrf.mxu0
        %v1170 = vadd.f32 0.0, %v1169
        %v1171 = vpop.f32.mrf.mxu0
        %v1172 = vpop.f32.mrf.mxu0
        %v1173 = vpop.f32.mrf.mxu0
        %1174 = vdwg.mxu0
        %v1175 = vmul.f32 %v1170, %v1122
        %v1176 = vpack.c.bf16 %v1175, %v1175
        %1177 = vrot.lane.b32.xlu0 %v834, 104
        %v1178 = vpop.permute.xlu0 %1177
        %1179 = vrot.lane.b32.xlu0 %v835, 104
        %v1180 = vpop.permute.xlu0 %1179
        %v1182 = vsel %vm837, %v1178, 0
        %v1185 = vsel %vm837, %v1180, 0
        %1187 = vmatprep.subr.bf16.mxu0 0
        %1188 = vmatpush1.bf16.xpose.msra.mxu0 0
        %1189 = vmatprep.subr.bf16.mxu0 0
        %1190 = vmatpush1.bf16.xpose.msra.mxu0 0
        %1191 = vmatprep.subr.bf16.mxu0 0
        %1192 = vmatpush1.bf16.xpose.msra.mxu0 0
        %1193 = vmatprep.subr.bf16.mxu0 0
        %1194 = vmatpush1.bf16.xpose.msra.mxu0 0
        %1195 = vmatprep.subr.bf16.mxu0 0
        %1196 = vmatpush1.bf16.xpose.msra.mxu0 0
        %1197 = vmatprep.subr.bf16.mxu0 0
        %1198 = vmatpush1.bf16.xpose.msra.mxu0 0
        %1199 = vmatprep.subr.bf16.mxu0 0
        %1200 = vmatpush1.bf16.xpose.msra.mxu0 0
        %1201 = vmatprep.subr.bf16.mxu0 0
        %1202 = vmatpush1.bf16.xpose.msra.mxu0 %v1185
        %1203 = vmatprep.subr.bf16.mxu0 0
        %1204 = vmatpush2.bf16.xpose.msra.mxu0 0
        %1205 = vmatprep.subr.bf16.mxu0 0
        %1206 = vmatpush2.bf16.xpose.msra.mxu0 0
        %1207 = vmatprep.subr.bf16.mxu0 0
        %1208 = vmatpush2.bf16.xpose.msra.mxu0 0
        %1209 = vmatprep.subr.bf16.mxu0 0
        %1210 = vmatpush2.bf16.xpose.msra.mxu0 0
        %1211 = vmatprep.subr.bf16.mxu0 0
        %1212 = vmatpush2.bf16.xpose.msra.mxu0 0
        %1213 = vmatprep.subr.bf16.mxu0 0
        %1214 = vmatpush2.bf16.xpose.msra.mxu0 0
        %1215 = vmatprep.subr.bf16.mxu0 0
        %1216 = vmatpush2.bf16.xpose.msra.mxu0 0
        %1217 = vmatprep.subr.bf16.mxu0 0
        %1218 = vmatpush2.bf16.xpose.msra.mxu0 0
        %1219 = vmatprep.mubr.bf16.mxu0 0
        %1220 = vmatmul.mubr.bf16.gmra.mxu0 %v1182
        %v1221 = vpop.f32.mrf.mxu0
        %v1222 = vadd.f32 0.0, %v1221
        %v1223 = vpop.f32.mrf.mxu0
        %v1224 = vpop.f32.mrf.mxu0
        %v1225 = vpop.f32.mrf.mxu0
        %1226 = vdwg.mxu0
        %v1227 = vsel %vm837, %v1222, -inf
        %1228 = vmax.xlane.f32.xlu0 %v1227
        %v1229 = vpop.xlane.xlu0 %1228
        %v1230 = vsub.f32 %v1222, %v1229
        %v1231 = vmul.f32 %v1230, 1.442695
        %v1232 = vpow.pop %v1231
        %v1233 = vsel %vm837, %v1232, 0.0
        %1234 = vadd.xlane.f32.xlu0 %v1233
        %v1235 = vpop.xlane.xlu0 %1234
        %v1236 = vrcp.pop %v1235
        %v1237 = vmul.f32 %v1232, %v1236
        %s1238 = scalar_lea.vmem %s619, 24 [#allocation18]
        %1239 = vst.msk [vmem:[%s1238] sm:$0xff] %vm837, %v1237
        %v1240 = vpack.c.bf16 %v1232, %v1232
        %1241 = vrot.lane.b32.xlu0 %v836, 104
        %v1242 = vpop.permute.xlu0 %1241
        %v1244 = vsel %vm837, %v1240, 0
        %v1247 = vsel %vm900, %v1242, 0
        %1249 = vmatprep.subr.bf16.mxu0 0
        %1250 = vmatpush1.bf16.msra.mxu0 0
        %1251 = vmatprep.subr.bf16.mxu0 0
        %1252 = vmatpush1.bf16.msra.mxu0 0
        %1253 = vmatprep.subr.bf16.mxu0 0
        %1254 = vmatpush1.bf16.msra.mxu0 0
        %1255 = vmatprep.subr.bf16.mxu0 0
        %1256 = vmatpush1.bf16.msra.mxu0 0
        %1257 = vmatprep.subr.bf16.mxu0 0
        %1258 = vmatpush1.bf16.msra.mxu0 0
        %1259 = vmatprep.subr.bf16.mxu0 0
        %1260 = vmatpush1.bf16.msra.mxu0 0
        %1261 = vmatprep.subr.bf16.mxu0 0
        %1262 = vmatpush1.bf16.msra.mxu0 0
        %1263 = vmatprep.subr.bf16.mxu0 0
        %1264 = vmatpush1.bf16.msra.mxu0 %v1247
        %1265 = vmatprep.subr.bf16.mxu0 0
        %1266 = vmatpush2.bf16.msra.mxu0 0
        %1267 = vmatprep.subr.bf16.mxu0 0
        %1268 = vmatpush2.bf16.msra.mxu0 0
        %1269 = vmatprep.subr.bf16.mxu0 0
        %1270 = vmatpush2.bf16.msra.mxu0 0
        %1271 = vmatprep.subr.bf16.mxu0 0
        %1272 = vmatpush2.bf16.msra.mxu0 0
        %1273 = vmatprep.subr.bf16.mxu0 0
        %1274 = vmatpush2.bf16.msra.mxu0 0
        %1275 = vmatprep.subr.bf16.mxu0 0
        %1276 = vmatpush2.bf16.msra.mxu0 0
        %1277 = vmatprep.subr.bf16.mxu0 0
        %1278 = vmatpush2.bf16.msra.mxu0 0
        %1279 = vmatprep.subr.bf16.mxu0 0
        %1280 = vmatpush2.bf16.msra.mxu0 0
        %1281 = vmatprep.mubr.bf16.mxu0 0
        %1282 = vmatmul.mubr.bf16.gmra.mxu0 %v1244
        %v1283 = vpop.f32.mrf.mxu0
        %v1284 = vadd.f32 0.0, %v1283
        %v1285 = vpop.f32.mrf.mxu0
        %v1286 = vpop.f32.mrf.mxu0
        %v1287 = vpop.f32.mrf.mxu0
        %1288 = vdwg.mxu0
        %v1289 = vmul.f32 %v1284, %v1236
        %v1290 = vpack.c.bf16 %v1289, %v1289
        %1292 = vrot.lane.b32.xlu0 %v1062, 8
        %v1293 = vpop.permute.xlu0 %1292
        %1295 = vrot.lane.b32.xlu0 %v1176, 16
        %v1296 = vpop.permute.xlu0 %1295
        %1298 = vrot.lane.b32.xlu0 %v1290, 24
        %v1299 = vpop.permute.xlu0 %1298
        %v1302 = vsel %vm837, %v945, %v1293
        %vm1303 = vcmask 130048
        %v1305 = vsel %vm1303, %v1302, %v1296
        %vm1306 = vcmask 195584
        %v1308 = vsel %vm1306, %v1305, %v1299
        %s1309 = smul.addr %s625, 4
        %s1310 = scalar_lea.vmem %s9, %s1309
        %v1311 = vld [vmem:[%s1310] sm:$0xf]
        %v1312 = vld [vmem:[%s1310 + $0x4] sm:$0xf]
        %v1313 = vld [vmem:[%s1310 + $0x8] sm:$0xf]
        %v1314 = vld [vmem:[%s1310 + $0xc] sm:$0xf]
        %v1319 = vunpack.c.l.b16 %v1311
        %v1320 = vunpack.c.l.b16 %v1312
        %v1321 = vunpack.c.l.b16 %v1313
        %v1322 = vunpack.c.l.b16 %v1314
        %v1323 = vpack.c.b16 %v1320, %v1319
        %v1324 = vpack.c.b16 %v1322, %v1321
        %v1327 = vsel %vm652, %v1308, 0
        %1329 = vmatprep.subr.bf16.mxu0 0
        %1330 = vmatpush1.bf16.msra.mxu0 0
        %1331 = vmatprep.subr.bf16.mxu0 0
        %1332 = vmatpush1.bf16.msra.mxu0 0
        %1333 = vmatprep.subr.bf16.mxu0 0
        %1334 = vmatpush1.bf16.msra.mxu0 0
        %1335 = vmatprep.subr.bf16.mxu0 0
        %1336 = vmatpush1.bf16.msra.mxu0 0
        %1337 = vmatprep.subr.bf16.mxu0 0
        %1338 = vmatpush1.bf16.msra.mxu0 0
        %1339 = vmatprep.subr.bf16.mxu0 0
        %1340 = vmatpush1.bf16.msra.mxu0 0
        %1341 = vmatprep.subr.bf16.mxu0 0
        %1342 = vmatpush1.bf16.msra.mxu0 %v1324
        %1343 = vmatprep.subr.bf16.mxu0 0
        %1344 = vmatpush1.bf16.msra.mxu0 %v1323
        %1345 = vmatprep.subr.bf16.mxu0 0
        %1346 = vmatpush2.bf16.msra.mxu0 0
        %1347 = vmatprep.subr.bf16.mxu0 0
        %1348 = vmatpush2.bf16.msra.mxu0 0
        %1349 = vmatprep.subr.bf16.mxu0 0
        %1350 = vmatpush2.bf16.msra.mxu0 0
        %1351 = vmatprep.subr.bf16.mxu0 0
        %1352 = vmatpush2.bf16.msra.mxu0 0
        %1353 = vmatprep.subr.bf16.mxu0 0
        %1354 = vmatpush2.bf16.msra.mxu0 0
        %1355 = vmatprep.subr.bf16.mxu0 0
        %1356 = vmatpush2.bf16.msra.mxu0 0
        %1357 = vmatprep.subr.bf16.mxu0 0
        %1358 = vmatpush2.bf16.msra.mxu0 0
        %1359 = vmatprep.subr.bf16.mxu0 0
        %1360 = vmatpush2.bf16.msra.mxu0 0
        %1361 = vmatprep.mubr.bf16.mxu0 0
        %1362 = vmatmul.mubr.bf16.gmra.mxu0 %v1327
        %v1363 = vpop.f32.mrf.mxu0
        %v1364 = vadd.f32 0.0, %v1363
        %v1365 = vpop.f32.mrf.mxu0
        %v1366 = vpop.f32.mrf.mxu0
        %v1367 = vpop.f32.mrf.mxu0
        %1368 = vdwg.mxu0
        %p1369 = scmp.eq.s32.totalorder %s46, 0
        // Predicated region
        $region101: #{tpu_custom_call.1} parent=63 // pred_check
          %p1370 = pneg %p1369
        $region102: #{tpu_custom_call.1} parent=63 // pred_check_branch
          %1372 = sbr.rel (%p1370) target = $region104
        $region103: #{tpu_custom_call.1} parent=63 // pred_region
          %v1373 = vld [vmem:[%s10] sm:$0x1]
          %v1375 = vlaneseq
          %v1376 = vshrl.u32 %v1375, 7
          %v1377 = vsub.s32 0, %v1376
          %v1378 = vrot.slane %v1373, %v1377
          %v1380 = vadd.f32 %v1364, %v1378
          %1381 = vst.msk [vmem:[%s612] sm:$0xff] %vm652, %v1380
        $region104: #{tpu_custom_call.1} parent=63 // pred_fallthru
          _
        %p1382 = scmp.gt.s32.totalorder %s46, 0
        // Predicated region
        $region105: #{tpu_custom_call.1} parent=63 // pred_check
          %p1383 = pneg %p1382
        $region106: #{tpu_custom_call.1} parent=63 // pred_check_branch
          %1385 = sbr.rel (%p1383) target = $region108
        $region107: #{tpu_custom_call.1} parent=63 // pred_region
          %v1386 = vld [vmem:[%s612] sm:$0xff]
          %v1387 = vadd.f32 %v1386, %v1364
          %1388 = vst.msk [vmem:[%s612] sm:$0xff] %vm652, %v1387
        $region108: #{tpu_custom_call.1} parent=63 // pred_fallthru
          _
        %s1389 = sand.u32 %s316, 1
        %s1390 = scalar_lea.sflag [#allocation4], %s1389
        %s1391 = sand.u32 %s316, 1
        %s1392 = smul.addr %s1391, 8
        %s1393 = scalar_lea.vmem [#allocation17], %s1392
        %s1394 = sand.u32 %s346, 1
        %s1395 = scalar_lea.sflag [#allocation19], %s1394
        %s1396 = sand.u32 %s346, 1
        %s1397 = smul.addr %s1396, 32
        %s1398 = scalar_lea.vmem [#allocation18], %s1397
        // Predicated region
        $region109: #{tpu_custom_call.1} parent=63 // pred_check
          %p1399 = pneg %p326
        $region110: #{tpu_custom_call.1} parent=63 // pred_check_branch
          %1401 = sbr.rel (%p1399) target = $region112
        $region111: #{tpu_custom_call.1} parent=63 // pred_region
          %s1403 = ssub.s32 128, 128
          %1404 = vsyncadd %s1390, %s1403
          %s1405 = sadd.s32 %s45, %s44
          %s1406 = smul.addr %s1405, 128
          %s1407 = scalar_lea.hbm %s11, %s1406
          %s1409 = sshll.u32 %s1393, 4
          %s1410 = int_to_ptr.vmem [resolvable:$true] %s1409
          %1412 = dma.vmem_to_hbm [thread:$0]  %s1410, 128, %s1407, %s1390
        $region112: #{tpu_custom_call.1} parent=63 // pred_fallthru
          _
        // Predicated region
        $region113: #{tpu_custom_call.1} parent=63 // pred_check
          %p1413 = pneg %p356
        $region114: #{tpu_custom_call.1} parent=63 // pred_check_branch
          %1415 = sbr.rel (%p1413) target = $region116
        $region115: #{tpu_custom_call.1} parent=63 // pred_region
          %s1416 = smul.u32 4, %s46
          %s1418 = ssub.s32 512, 512
          %1419 = vsyncadd %s1395, %s1418
          %s1420 = sadd.s32 %s45, %s1416
          %s1421 = smul.addr %s44, 4
          %s1422 = sadd.s32 %s1420, %s1421
          %s1423 = smul.addr %s1422, 128
          %s1424 = scalar_lea.hbm %s12, %s1423
          %s1425 = sshll.u32 %s1398, 4
          %s1426 = int_to_ptr.vmem [resolvable:$true] %s1425
          %1431 = dma.vmem_to_hbm [thread:$0]  %s1426, 512, %s1424, %s1395, 128, 128, 8
        $region116: #{tpu_custom_call.1} parent=63 // pred_fallthru
          _
      $region64: #{tpu_custom_call.1} parent=5 // pred_fallthru
        _
      %p1432 = scmp.le.s32.totalorder 2, %s34
      // Predicated region
      $region117: #{tpu_custom_call.1} parent=5 // pred_check
        %p1433 = pneg %p1432
      $region118: #{tpu_custom_call.1} parent=5 // pred_check_branch
        %1435 = sbr.rel (%p1433) target = $region120
      $region119: #{tpu_custom_call.1} parent=5 // pred_region
        %s1436 = ssub.s32 %s34, 2
        // Predicated region
        $region121: #{tpu_custom_call.1} parent=119 // pred_check
          %p1437 = pneg %p332
        $region122: #{tpu_custom_call.1} parent=119 // pred_check_branch
          %1439 = sbr.rel (%p1437) target = $region124
        $region123: #{tpu_custom_call.1} parent=119 // pred_region
          %s1440 = sand.u32 %s317, 1
          %s1441 = scalar_lea.sflag [#allocation4], %s1440
          %s1442 = sand.u32 %s317, 1
          %s1443 = smul.addr %s1442, 8
          %s1444 = scalar_lea.vmem [#allocation17], %s1443
          %1445 = dma.done %s1441, 128
        $region124: #{tpu_custom_call.1} parent=119 // pred_fallthru
          _
        // Predicated region
        $region125: #{tpu_custom_call.1} parent=119 // pred_check
          %p1446 = pneg %p362
        $region126: #{tpu_custom_call.1} parent=119 // pred_check_branch
          %1448 = sbr.rel (%p1446) target = $region128
        $region127: #{tpu_custom_call.1} parent=119 // pred_region
          %s1449 = sand.u32 %s347, 1
          %s1450 = scalar_lea.sflag [#allocation19], %s1449
          %s1451 = sand.u32 %s347, 1
          %s1452 = smul.addr %s1451, 32
          %s1453 = scalar_lea.vmem [#allocation18], %s1452
          %1454 = dma.done %s1450, 512
        $region128: #{tpu_custom_call.1} parent=119 // pred_fallthru
          _
      $region120: #{tpu_custom_call.1} parent=5 // pred_fallthru
        _
    $region6: #{tpu_custom_call.1} parent=1 // loop_footer
      %s38 = sadd.s32 1, %s34
    $region7: #{tpu_custom_call.1} parent=1 // loop_footer_branch
      %33 = sbr.rel target = $region3
    $region8: #{tpu_custom_call.1} parent=1 // loop_exit
      _
    %1455 = vsyncpa [#allocation3], 1
    %s1456 = scalar_lea.sflag [#allocation3], 1
    %1457 = vsyncpa %s1456, 1
    %1458 = vsyncpa [#allocation6], 1
    %s1459 = scalar_lea.sflag [#allocation6], 1
    %1460 = vsyncpa %s1459, 1
    %1461 = vsyncpa [#allocation9], 1
    %1462 = vsyncpa [#allocation12], 1
    %1463 = vsyncpa [#allocation15], 1
    %1464 = vsyncpa [#allocation4], 1
    %s1465 = scalar_lea.sflag [#allocation4], 1
    %1466 = vsyncpa %s1465, 1
    %1467 = vsyncpa [#allocation19], 1
    %s1468 = scalar_lea.sflag [#allocation19], 1
    %1469 = vsyncpa %s1468, 1

</llo_original>
